<compile_context>
chip_gen: v7x
topology: tpu7x:2x2x1
jax: 0.10.0
libtpu: 0.0.40
codegen_flags: <defaults>
</compile_context>

<pallas_src>
import jax
import jax.numpy as jnp
from jax.experimental import pallas as pl
from jax.experimental.pallas import tpu as pltpu

EPS = 1e-5  # matches calc_mean_std eps


# --------------------------------------------------------------------------- #
# Kernel
# --------------------------------------------------------------------------- #
def _adaattn_kernel(ck_ref, g_ref, hh_ref, cont_ref, cmu_ref, crs_ref,
                    wf_ref, bf_ref, out_ref, f_scr, m_scr, l_scr, acc_scr):
    """Grid = (batch, content-pixel tile, style-pixel tile).

    The style axis (innermost, 'arbitrary') is an online-softmax reduction.
    """
    f32, bf16 = jnp.float32, jnp.bfloat16
    kv = pl.program_id(2)

    @pl.when(kv == 0)
    def _init():
        # f = wf @ content_key + bf (1x1 conv, channel-major), computed once per
        # (batch, Nc tile) and reused across every style tile via scratch.
        f = jnp.dot(wf_ref[...], ck_ref[0], preferred_element_type=f32) + bf_ref[...]
        f_scr[...] = f.astype(bf16)
        m_scr[...] = jnp.full(m_scr.shape, -jnp.inf, dtype=f32)
        l_scr[...] = jnp.zeros(l_scr.shape, dtype=f32)
        acc_scr[...] = jnp.zeros(acc_scr.shape, dtype=f32)

    # Attention logits, style-pixel-major: s_t[m, n] = g(style_key)[:, m] . f[:, n].
    # (Tns, Ck) x (Ck, Tn) -> (Tns, Tn): standard MXU contraction, no transposes.
    s_t = jnp.dot(g_ref[0], f_scr[...], preferred_element_type=f32)

    # Online softmax over the style axis (sublane axis).  Stats are (1, Tn) so they
    # broadcast onto both s_t and the (2C, Tn) accumulator without any transpose.
    m_prev = m_scr[...]
    m_new = jnp.maximum(m_prev, jnp.max(s_t, axis=0, keepdims=True))      # (1, Tn)
    alpha = jnp.exp(m_prev - m_new)                                       # (1, Tn)
    p = jnp.exp(s_t - m_new)                                              # (Tns, Tn)
    l_scr[...] = alpha * l_scr[...] + jnp.sum(p, axis=0, keepdims=True)
    # Fused attention-weighted moments: hh = [h; h*h] (2C, Tns) @ p (Tns, Tn).
    acc_scr[...] = alpha * acc_scr[...] + jnp.dot(
        hh_ref[0], p.astype(bf16), preferred_element_type=f32)
    m_scr[...] = m_new

    @pl.when(kv == pl.num_programs(2) - 1)
    def _finalize():
        c = cont_ref.shape[1]
        # EUP reciprocal: deliberate ~1e-3 deviation from an exact softmax divide.
        moments = acc_scr[...] * pl.reciprocal(l_scr[...], approx=True)   # (2C, Tn)
        mean = moments[:c]
        ex2 = moments[c:]
        std = jnp.sqrt(jnp.maximum(ex2 - mean * mean, 0.0))               # relu->sqrt
        # std * mean_variance_norm(content) + mean; lane-dense channel-major store.
        out_ref[0] = std * (cont_ref[0] - cmu_ref[0]) * crs_ref[0] + mean


# --------------------------------------------------------------------------- #
# Generation-aware sizing helpers
# --------------------------------------------------------------------------- #
def _round_up(x, m):
    return (x + m - 1) // m * m


def _vmem_limit_bytes():
    """Scoped-VMEM request: physical capacity minus ~25% headroom, capped at 100 MiB
    (=> ~48 MiB on v7x, ~96 MiB on v5e/v6e)."""
    try:
        cap = int(pltpu.get_tpu_info().vmem_capacity_bytes)
    except Exception:
        cap = 64 * 1024 * 1024  # conservative (v7x-sized) fallback
    return min(cap * 3 // 4, 100 * 1024 * 1024)


def _step_vmem_bytes(tn, tns, c, ck):
    """Rough per-grid-step working set: double-buffered streams + scratch + live
    softmax intermediates."""
    b = 0
    b += 2 * ck * tn * 2                              # content-key tile (bf16, 2 bufs)
    b += 2 * c * tn * 4                               # content tile (f32)
    b += 2 * c * tn * 4                               # output tile (f32)
    b += 2 * tns * ck * 2                             # g tile (bf16)
    b += 2 * 2 * c * tns * 2                          # hh tile (bf16)
    b += 2 * c * tn * 4 + ck * tn * 2 + 2 * tn * 4    # acc / f / m / l scratch
    b += 3 * tns * tn * 4                             # s_t, p and friends (f32)
    return b


def _choose_tiles(nc, ns, c, ck, budget):
    # Style-pixel tile: tile only when Ns is large and a multiple-of-128 tile divides it.
    tns = ns
    if ns > 2048:
        for cand in (2048, 1024, 512, 256, 128):
            if ns % cand == 0:
                tns = cand
                break
        # TODO(synk): pad + mask the style axis when no multiple-of-128 tile divides Ns.
    # Content-pixel tile: largest lane-dense candidate whose working set fits the budget.
    fitting = [t for t in (512, 384, 256, 128) if _step_vmem_bytes(t, tns, c, ck) <= budget]
    cap = fitting[0] if fitting else 128
    if nc % cap == 0:
        tn = cap
    else:
        tn = next((t for t in (512, 384, 256, 128) if t <= cap and nc % t == 0), 0)
        if not tn:
            tn = cap if nc > cap else _round_up(nc, 128)
    return tn, tns, _round_up(nc, tn)


_SINGLE_BUFFER_OK = None


def _single_buffer_supported():
    """Feature-probe pipeline_mode=pl.Buffered(1); fall back to default buffering."""
    global _SINGLE_BUFFER_OK
    if _SINGLE_BUFFER_OK is None:
        try:
            def _copy(x_ref, o_ref):
                o_ref[...] = x_ref[...]

            fn = pl.pallas_call(
                _copy,
                out_shape=jax.ShapeDtypeStruct((8, 128), jnp.float32),
                grid=(1,),
                in_specs=[pl.BlockSpec((8, 128), lambda i: (0, 0),
                                       pipeline_mode=pl.Buffered(1))],
                out_specs=pl.BlockSpec((8, 128), lambda i: (0, 0)),
            )
            jax.jit(fn).lower(jax.ShapeDtypeStruct((8, 128), jnp.float32)).compile()
            _SINGLE_BUFFER_OK = True
        except Exception:
            _SINGLE_BUFFER_OK = False
    return _SINGLE_BUFFER_OK


# --------------------------------------------------------------------------- #
# Wrapper
# --------------------------------------------------------------------------- #
@jax.jit
def adaattn_forward(content, style, content_key, style_key, params):
    """content/style/content_key/style_key are NCHW float32 arrays."""
    f32, bf16 = jnp.float32, jnp.bfloat16
    B, C, Hc, Wc = content.shape
    _, _, Hs, Ws = style.shape
    Ck = content_key.shape[1]
    Nc, Ns = Hc * Wc, Hs * Ws

    # ---- XLA pre-passes (hoisted out of the kernel) ------------------------- #
    # Native channel-major flattening (reshape only) for the big content tensors.
    ck_cm = content_key.reshape(B, Ck, Nc).astype(bf16)       # (B, Ck, Nc)
    cont = content.reshape(B, C, Nc)                          # (B, C, Nc) f32
    sk = style_key.reshape(B, Ck, Ns).astype(bf16)
    st = style.reshape(B, C, Ns).astype(bf16)

    # Global content statistics over the full (unpadded) Nc axis (PyTorch .var is
    # unbiased, n-1).
    cmu = jnp.mean(cont, axis=2, keepdims=True)               # (B, C, 1)
    cvar = jnp.sum((cont - cmu) ** 2, axis=2, keepdims=True) / (Nc - 1) + EPS
    crs = jax.lax.rsqrt(cvar)                                 # (B, C, 1)

    # Style-side 1x1 convs + second-moment features depend only on b: hoist.
    g_pm = (jnp.einsum("oi,bim->bmo", params["wg"].astype(bf16), sk,
                       preferred_element_type=f32)
            + params["bg"][None, None, :]).astype(bf16)       # (B, Ns, Ck) pixel-major
    h = jnp.einsum("oi,bim->bom", params["wh"].astype(bf16), st,
                   preferred_element_type=f32) + params["bh"][None, :, None]
    hh = jnp.concatenate([h, h * h], axis=1).astype(bf16)     # (B, 2C, Ns)

    wf_b = params["wf"].astype(bf16)                          # (Ck, Ck)
    bf_r = params["bf"].reshape(Ck, 1)                        # (Ck, 1) f32

    # ---- Generation-aware tiling / VMEM budget ------------------------------ #
    vmem_limit = _vmem_limit_bytes()
    tile_nc, tile_ns, nc_pad = _choose_tiles(Nc, Ns, C, Ck, budget=(vmem_limit * 3) // 5)
    if nc_pad != Nc:
        pad = nc_pad - Nc
        ck_cm = jnp.pad(ck_cm, ((0, 0), (0, 0), (0, pad)))
        cont_p = jnp.pad(cont, ((0, 0), (0, 0), (0, pad)))
    else:
        cont_p = cont

    grid = (B, nc_pad // tile_nc, Ns // tile_ns)

    # Single-buffer the grid-invariant weight inputs when supported (the b-invariant
    # cmu/crs could be single-buffered the same way; VMEM delta is negligible).
    const_spec = ({"pipeline_mode": pl.Buffered(1)} if _single_buffer_supported() else {})

    cost = pl.CostEstimate(
        flops=2 * B * nc_pad * (Ck * Ck + Ns * Ck + Ns * 2 * C),
        transcendentals=B * nc_pad * Ns,
        bytes_accessed=(ck_cm.size * 2 + g_pm.size * 2 + hh.size * 2
                        + cont_p.size * 4 + cmu.size * 4 + crs.size * 4
                        + wf_b.size * 2 + bf_r.size * 4 + B * C * nc_pad * 4),
    )

    out_flat = pl.pallas_call(
        _adaattn_kernel,
        out_shape=jax.ShapeDtypeStruct((B, C, nc_pad), f32),
        grid_spec=pltpu.PrefetchScalarGridSpec(
            num_scalar_prefetch=0,
            grid=grid,
            in_specs=[
                pl.BlockSpec((1, Ck, tile_nc), lambda b, i, k: (b, 0, i)),     # content_key
                pl.BlockSpec((1, tile_ns, Ck), lambda b, i, k: (b, k, 0)),     # g (pixel-major)
                pl.BlockSpec((1, 2 * C, tile_ns), lambda b, i, k: (b, 0, k)),  # [h; h*h]
                pl.BlockSpec((1, C, tile_nc), lambda b, i, k: (b, 0, i)),      # content
                pl.BlockSpec((1, C, 1), lambda b, i, k: (b, 0, 0)),            # content mean
                pl.BlockSpec((1, C, 1), lambda b, i, k: (b, 0, 0)),            # content 1/std
                pl.BlockSpec((Ck, Ck), lambda b, i, k: (0, 0), **const_spec),  # wf
                pl.BlockSpec((Ck, 1), lambda b, i, k: (0, 0), **const_spec),   # bf
            ],
            out_specs=pl.BlockSpec((1, C, tile_nc), lambda b, i, k: (b, 0, i)),
            scratch_shapes=[
                pltpu.VMEM((Ck, tile_nc), bf16),      # f(content_key) tile
                pltpu.VMEM((1, tile_nc), f32),        # running max
                pltpu.VMEM((1, tile_nc), f32),        # running sum
                pltpu.VMEM((2 * C, tile_nc), f32),    # [mean; E[x^2]] accumulator
            ],
        ),
        compiler_params=pltpu.CompilerParams(
            dimension_semantics=("parallel", "parallel", "arbitrary"),
            vmem_limit_bytes=vmem_limit,
        ),
        cost_estimate=cost,
    )(ck_cm, g_pm, hh, cont_p, cmu, crs, wf_b, bf_r)

    # Drop Nc padding; (B, C, Nc) -> NCHW is a pure reshape (stays lane-dense).
    return out_flat[:, :, :Nc].reshape(B, C, Hc, Wc)


# --------------------------------------------------------------------------- #
# Pure-JAX reference (matching bf16 matmul operands, f32 accumulation)
# --------------------------------------------------------------------------- #
@jax.jit
def adaattn_reference(content, style, content_key, style_key, params):
    B, C, Hc, Wc = content.shape
    _, _, Hs, Ws = style.shape
    Ck = content_key.shape[1]
    Nc, Ns = Hc * Wc, Hs * Ws
    f32, bf16 = jnp.float32, jnp.bfloat16

    ck = content_key.reshape(B, Ck, Nc).astype(bf16)
    sk = style_key.reshape(B, Ck, Ns).astype(bf16)
    st = style.reshape(B, C, Ns).astype(bf16)
    cont = content.reshape(B, C, Nc)

    f = jnp.einsum("oi,bin->bon", params["wf"].astype(bf16), ck,
                   preferred_element_type=f32) + params["bf"][None, :, None]
    g = jnp.einsum("oi,bin->bon", params["wg"].astype(bf16), sk,
                   preferred_element_type=f32) + params["bg"][None, :, None]
    h = jnp.einsum("oi,bin->bon", params["wh"].astype(bf16), st,
                   preferred_element_type=f32) + params["bh"][None, :, None]

    s = jnp.einsum("bkn,bkm->bnm", f.astype(bf16), g.astype(bf16),
                   preferred_element_type=f32)                    # (B, Nc, Ns)
    a = jax.nn.softmax(s, axis=-1)

    hh = jnp.concatenate([h, h * h], axis=1).astype(bf16)         # (B, 2C, Ns)
    moments = jnp.einsum("bcm,bnm->bcn", hh, a.astype(bf16),
                         preferred_element_type=f32)              # (B, 2C, Nc)
    mean, ex2 = moments[:, :C], moments[:, C:]
    std = jnp.sqrt(jnp.maximum(ex2 - mean * mean, 0.0))

    cmu = jnp.mean(cont, axis=2, keepdims=True)
    cvar = jnp.sum((cont - cmu) ** 2, axis=2, keepdims=True) / (Nc - 1) + EPS
    out = std * (cont - cmu) * jax.lax.rsqrt(cvar) + mean
    return out.reshape(B, C, Hc, Wc)


def init_params(key, in_planes, key_planes):
    """1x1-conv params stored PyTorch-style: (Cout, Cin) weights, (Cout,) biases."""
    ks = jax.random.split(key, 6)
    sk_ = 1.0 / jnp.sqrt(key_planes)
    sc = 1.0 / jnp.sqrt(in_planes)
    u = jax.random.uniform
    return {
        "wf": u(ks[0], (key_planes, key_planes), jnp.float32, -sk_, sk_),
        "bf": u(ks[1], (key_planes,), jnp.float32, -sk_, sk_),
        "wg": u(ks[2], (key_planes, key_planes), jnp.float32, -sk_, sk_),
        "bg": u(ks[3], (key_planes,), jnp.float32, -sk_, sk_),
        "wh": u(ks[4], (in_planes, in_planes), jnp.float32, -sc, sc),
        "bh": u(ks[5], (in_planes,), jnp.float32, -sc, sc),
    }


if __name__ == "__main__":
    B = 2
    C = 32        # in_planes
    CK = 32       # key_planes
    HC = WC = 16  # content spatial -> Nc = 256
    HS = WS = 8   # style spatial   -> Ns = 64

    key = jax.random.PRNGKey(0)
    kc, ks, kck, ksk, kp = jax.random.split(key, 5)
    content = jax.random.normal(kc, (B, C, HC, WC), jnp.float32)
    style = jax.random.normal(ks, (B, C, HS, WS), jnp.float32)
    content_key = jax.random.normal(kck, (B, CK, HC, WC), jnp.float32)
    style_key = jax.random.normal(ksk, (B, CK, HS, WS), jnp.float32)
    params = init_params(kp, C, CK)

    out = jax.block_until_ready(
        adaattn_forward(content, style, content_key, style_key, params))
    ref = jax.block_until_ready(
        adaattn_reference(content, style, content_key, style_key, params))

    assert out.shape == (B, C, HC, WC)
    max_err = float(jnp.max(jnp.abs(out - ref)))
    mean_err = float(jnp.mean(jnp.abs(out - ref)))
    assert max_err < 1e-1 and mean_err < 1e-2, (max_err, mean_err)
    print("KERNEL_OK")
</pallas_src>

<mosaic_0001>
module attributes {stable_mosaic.version = 11 : i64} {
  func.func @_adaattn_kernel(%arg0: i32, %arg1: i32, %arg2: i32, %arg3: memref<1x32x256xbf16, #tpu.memory_space<vmem>>, %arg4: memref<1x64x32xbf16, #tpu.memory_space<vmem>>, %arg5: memref<1x64x64xbf16, #tpu.memory_space<vmem>>, %arg6: memref<1x32x256xf32, #tpu.memory_space<vmem>>, %arg7: memref<1x32x1xf32, #tpu.memory_space<vmem>>, %arg8: memref<1x32x1xf32, #tpu.memory_space<vmem>>, %arg9: memref<32x32xbf16, #tpu.memory_space<vmem>>, %arg10: memref<32x1xf32, #tpu.memory_space<vmem>>, %arg11: memref<1x32x256xf32, #tpu.memory_space<vmem>>, %arg12: memref<32x256xbf16, #tpu.memory_space<vmem>>, %arg13: memref<1x256xf32, #tpu.memory_space<vmem>>, %arg14: memref<1x256xf32, #tpu.memory_space<vmem>>, %arg15: memref<64x256xf32, #tpu.memory_space<vmem>>) attributes {dimension_semantics = [#tpu.dimension_semantics<parallel>, #tpu.dimension_semantics<parallel>, #tpu.dimension_semantics<arbitrary>], iteration_bounds = array<i64: 2, 1, 1>, scalar_prefetch = 0 : i64, scratch_operands = 4 : i64, tpu.core_type = #tpu.core_type<tc>, window_params = [{transform_indices = @transform_0, window_bounds = array<i64: 1, 32, 256>}, {transform_indices = @transform_1, window_bounds = array<i64: 1, 64, 32>}, {transform_indices = @transform_2, window_bounds = array<i64: 1, 64, 64>}, {transform_indices = @transform_3, window_bounds = array<i64: 1, 32, 256>}, {transform_indices = @transform_4, window_bounds = array<i64: 1, 32, 1>}, {transform_indices = @transform_5, window_bounds = array<i64: 1, 32, 1>}, {pipeline_mode = #tpu.pipeline_mode<synchronous>, transform_indices = @transform_6, window_bounds = array<i64: 32, 32>}, {pipeline_mode = #tpu.pipeline_mode<synchronous>, transform_indices = @transform_7, window_bounds = array<i64: 32, 1>}, {transform_indices = @transform_8, window_bounds = array<i64: 1, 32, 256>}]} {
    %c0_i32 = arith.constant 0 : i32
    %0 = arith.cmpi eq, %arg2, %c0_i32 : i32
    %1 = arith.extui %0 : i1 to i32
    %c0_i32_0 = arith.constant 0 : i32
    %2 = arith.cmpi ne, %1, %c0_i32_0 : i32
    scf.if %2 {
      %c0_25 = arith.constant 0 : index
      %c0_26 = arith.constant 0 : index
      %35 = vector.load %arg9[%c0_25, %c0_26] : memref<32x32xbf16, #tpu.memory_space<vmem>>, vector<32x32xbf16>
      %c0_27 = arith.constant 0 : index
      %c0_28 = arith.constant 0 : index
      %c0_29 = arith.constant 0 : index
      %36 = vector.load %arg3[%c0_27, %c0_28, %c0_29] : memref<1x32x256xbf16, #tpu.memory_space<vmem>>, vector<1x32x256xbf16>
      %37 = vector.shape_cast %36 : vector<1x32x256xbf16> to vector<32x256xbf16>
      %cst_30 = arith.constant dense<0.000000e+00> : vector<32x256xf32>
      %38 = tpu.matmul %35, %37, %cst_30 {dimension_numbers = #tpu.dot_dimension_numbers<[1], [0], [0], [1], [0, 0, 1, 1], [], []>} : vector<32x32xbf16>, vector<32x256xbf16>, vector<32x256xf32> -> vector<32x256xf32>
      %c0_31 = arith.constant 0 : index
      %c0_32 = arith.constant 0 : index
      %39 = vector.load %arg10[%c0_31, %c0_32] : memref<32x1xf32, #tpu.memory_space<vmem>>, vector<32x1xf32>
      %40 = vector.broadcast %39 : vector<32x1xf32> to vector<32x256xf32>
      %41 = arith.addf %38, %40 : vector<32x256xf32>
      %42 = arith.truncf %41 : vector<32x256xf32> to vector<32x256xbf16>
      %c0_33 = arith.constant 0 : index
      %c0_34 = arith.constant 0 : index
      %43 = vector.load %arg12[%c0_33, %c0_34] : memref<32x256xbf16, #tpu.memory_space<vmem>>, vector<32x256xbf16>
      tpu.vector_store %arg12[%c0_33, %c0_34], %42 {strides = array<i32>} : memref<32x256xbf16, #tpu.memory_space<vmem>>, vector<32x256xbf16>,
      %cst_35 = arith.constant 0xFF800000 : f32
      %44 = vector.broadcast %cst_35 : f32 to vector<1x256xf32>
      %c0_36 = arith.constant 0 : index
      %c0_37 = arith.constant 0 : index
      %45 = vector.load %arg13[%c0_36, %c0_37] : memref<1x256xf32, #tpu.memory_space<vmem>>, vector<1x256xf32>
      tpu.vector_store %arg13[%c0_36, %c0_37], %44 {strides = array<i32>} : memref<1x256xf32, #tpu.memory_space<vmem>>, vector<1x256xf32>,
      %cst_38 = arith.constant 0.000000e+00 : f32
      %46 = vector.broadcast %cst_38 : f32 to vector<1x256xf32>
      %c0_39 = arith.constant 0 : index
      %c0_40 = arith.constant 0 : index
      %47 = vector.load %arg14[%c0_39, %c0_40] : memref<1x256xf32, #tpu.memory_space<vmem>>, vector<1x256xf32>
      tpu.vector_store %arg14[%c0_39, %c0_40], %46 {strides = array<i32>} : memref<1x256xf32, #tpu.memory_space<vmem>>, vector<1x256xf32>,
      %cst_41 = arith.constant 0.000000e+00 : f32
      %48 = vector.broadcast %cst_41 : f32 to vector<64x256xf32>
      %c0_42 = arith.constant 0 : index
      %c0_43 = arith.constant 0 : index
      %49 = vector.load %arg15[%c0_42, %c0_43] : memref<64x256xf32, #tpu.memory_space<vmem>>, vector<64x256xf32>
      tpu.vector_store %arg15[%c0_42, %c0_43], %48 {strides = array<i32>} : memref<64x256xf32, #tpu.memory_space<vmem>>, vector<64x256xf32>,
    } else {
    }
    %c0 = arith.constant 0 : index
    %c0_1 = arith.constant 0 : index
    %c0_2 = arith.constant 0 : index
    %3 = vector.load %arg4[%c0, %c0_1, %c0_2] : memref<1x64x32xbf16, #tpu.memory_space<vmem>>, vector<1x64x32xbf16>
    %4 = vector.shape_cast %3 : vector<1x64x32xbf16> to vector<64x32xbf16>
    %c0_3 = arith.constant 0 : index
    %c0_4 = arith.constant 0 : index
    %5 = vector.load %arg12[%c0_3, %c0_4] : memref<32x256xbf16, #tpu.memory_space<vmem>>, vector<32x256xbf16>
    %cst = arith.constant dense<0.000000e+00> : vector<64x256xf32>
    %6 = tpu.matmul %4, %5, %cst {dimension_numbers = #tpu.dot_dimension_numbers<[1], [0], [0], [1], [0, 0, 1, 1], [], []>} : vector<64x32xbf16>, vector<32x256xbf16>, vector<64x256xf32> -> vector<64x256xf32>
    %c0_5 = arith.constant 0 : index
    %c0_6 = arith.constant 0 : index
    %7 = vector.load %arg13[%c0_5, %c0_6] : memref<1x256xf32, #tpu.memory_space<vmem>>, vector<1x256xf32>
    %cst_7 = arith.constant dense<0xFF800000> : vector<256xf32>
    %8 = vector.multi_reduction <maximumf>, %6, %cst_7 [0] : vector<64x256xf32> to vector<256xf32>
    %9 = vector.shape_cast %8 : vector<256xf32> to vector<1x256xf32>
    %10 = arith.maximumf %7, %9 : vector<1x256xf32>
    %11 = arith.subf %7, %10 : vector<1x256xf32>
    %12 = math.exp %11 : vector<1x256xf32>
    %13 = vector.broadcast %10 : vector<1x256xf32> to vector<64x256xf32>
    %14 = arith.subf %6, %13 : vector<64x256xf32>
    %15 = math.exp %14 : vector<64x256xf32>
    %c0_8 = arith.constant 0 : index
    %c0_9 = arith.constant 0 : index
    %16 = vector.load %arg14[%c0_8, %c0_9] : memref<1x256xf32, #tpu.memory_space<vmem>>, vector<1x256xf32>
    %17 = arith.mulf %12, %16 : vector<1x256xf32>
    %cst_10 = arith.constant dense<0.000000e+00> : vector<256xf32>
    %18 = vector.multi_reduction <add>, %15, %cst_10 [0] : vector<64x256xf32> to vector<256xf32>
    %19 = vector.shape_cast %18 : vector<256xf32> to vector<1x256xf32>
    %20 = arith.addf %17, %19 : vector<1x256xf32>
    %c0_11 = arith.constant 0 : index
    %c0_12 = arith.constant 0 : index
    %21 = vector.load %arg14[%c0_11, %c0_12] : memref<1x256xf32, #tpu.memory_space<vmem>>, vector<1x256xf32>
    tpu.vector_store %arg14[%c0_11, %c0_12], %20 {strides = array<i32>} : memref<1x256xf32, #tpu.memory_space<vmem>>, vector<1x256xf32>,
    %c0_13 = arith.constant 0 : index
    %c0_14 = arith.constant 0 : index
    %22 = vector.load %arg15[%c0_13, %c0_14] : memref<64x256xf32, #tpu.memory_space<vmem>>, vector<64x256xf32>
    %23 = vector.broadcast %12 : vector<1x256xf32> to vector<64x256xf32>
    %24 = arith.mulf %23, %22 : vector<64x256xf32>
    %c0_15 = arith.constant 0 : index
    %c0_16 = arith.constant 0 : index
    %c0_17 = arith.constant 0 : index
    %25 = vector.load %arg5[%c0_15, %c0_16, %c0_17] : memref<1x64x64xbf16, #tpu.memory_space<vmem>>, vector<1x64x64xbf16>
    %26 = vector.shape_cast %25 : vector<1x64x64xbf16> to vector<64x64xbf16>
    %27 = arith.truncf %15 : vector<64x256xf32> to vector<64x256xbf16>
    %cst_18 = arith.constant dense<0.000000e+00> : vector<64x256xf32>
    %28 = tpu.matmul %26, %27, %cst_18 {dimension_numbers = #tpu.dot_dimension_numbers<[1], [0], [0], [1], [0, 0, 1, 1], [], []>} : vector<64x64xbf16>, vector<64x256xbf16>, vector<64x256xf32> -> vector<64x256xf32>
    %29 = arith.addf %24, %28 : vector<64x256xf32>
    %c0_19 = arith.constant 0 : index
    %c0_20 = arith.constant 0 : index
    %30 = vector.load %arg15[%c0_19, %c0_20] : memref<64x256xf32, #tpu.memory_space<vmem>>, vector<64x256xf32>
    tpu.vector_store %arg15[%c0_19, %c0_20], %29 {strides = array<i32>} : memref<64x256xf32, #tpu.memory_space<vmem>>, vector<64x256xf32>,
    %c0_21 = arith.constant 0 : index
    %c0_22 = arith.constant 0 : index
    %31 = vector.load %arg13[%c0_21, %c0_22] : memref<1x256xf32, #tpu.memory_space<vmem>>, vector<1x256xf32>
    tpu.vector_store %arg13[%c0_21, %c0_22], %10 {strides = array<i32>} : memref<1x256xf32, #tpu.memory_space<vmem>>, vector<1x256xf32>,
    %c0_i32_23 = arith.constant 0 : i32
    %32 = arith.cmpi eq, %arg2, %c0_i32_23 : i32
    %33 = arith.extui %32 : i1 to i32
    %c0_i32_24 = arith.constant 0 : i32
    %34 = arith.cmpi ne, %33, %c0_i32_24 : i32
    scf.if %34 {
      %c0_25 = arith.constant 0 : index
      %c0_26 = arith.constant 0 : index
      %35 = vector.load %arg15[%c0_25, %c0_26] : memref<64x256xf32, #tpu.memory_space<vmem>>, vector<64x256xf32>
      %c0_27 = arith.constant 0 : index
      %c0_28 = arith.constant 0 : index
      %36 = vector.load %arg14[%c0_27, %c0_28] : memref<1x256xf32, #tpu.memory_space<vmem>>, vector<1x256xf32>
      %37 = tpu.reciprocal %36 {approx = true} : vector<1x256xf32> -> vector<1x256xf32>
      %38 = vector.broadcast %37 : vector<1x256xf32> to vector<64x256xf32>
      %39 = arith.mulf %35, %38 : vector<64x256xf32>
      %40 = vector.extract_strided_slice %39 {offsets = [0, 0], sizes = [32, 256], strides = [1, 1]} : vector<64x256xf32> to vector<32x256xf32>
      %41 = vector.extract_strided_slice %39 {offsets = [32, 0], sizes = [32, 256], strides = [1, 1]} : vector<64x256xf32> to vector<32x256xf32>
      %42 = arith.mulf %40, %40 : vector<32x256xf32>
      %43 = arith.subf %41, %42 : vector<32x256xf32>
      %cst_29 = arith.constant 0.000000e+00 : f32
      %44 = vector.broadcast %cst_29 : f32 to vector<32x256xf32>
      %45 = arith.maximumf %43, %44 : vector<32x256xf32>
      %46 = math.sqrt %45 : vector<32x256xf32>
      %c0_30 = arith.constant 0 : index
      %c0_31 = arith.constant 0 : index
      %c0_32 = arith.constant 0 : index
      %47 = vector.load %arg6[%c0_30, %c0_31, %c0_32] : memref<1x32x256xf32, #tpu.memory_space<vmem>>, vector<1x32x256xf32>
      %48 = vector.shape_cast %47 : vector<1x32x256xf32> to vector<32x256xf32>
      %c0_33 = arith.constant 0 : index
      %c0_34 = arith.constant 0 : index
      %c0_35 = arith.constant 0 : index
      %49 = vector.load %arg7[%c0_33, %c0_34, %c0_35] : memref<1x32x1xf32, #tpu.memory_space<vmem>>, vector<1x32x1xf32>
      %50 = vector.shape_cast %49 : vector<1x32x1xf32> to vector<32x1xf32>
      %51 = vector.broadcast %50 : vector<32x1xf32> to vector<32x256xf32>
      %52 = arith.subf %48, %51 : vector<32x256xf32>
      %53 = arith.mulf %46, %52 : vector<32x256xf32>
      %c0_36 = arith.constant 0 : index
      %c0_37 = arith.constant 0 : index
      %c0_38 = arith.constant 0 : index
      %54 = vector.load %arg8[%c0_36, %c0_37, %c0_38] : memref<1x32x1xf32, #tpu.memory_space<vmem>>, vector<1x32x1xf32>
      %55 = vector.shape_cast %54 : vector<1x32x1xf32> to vector<32x1xf32>
      %56 = vector.broadcast %55 : vector<32x1xf32> to vector<32x256xf32>
      %57 = arith.mulf %53, %56 : vector<32x256xf32>
      %58 = arith.addf %57, %40 : vector<32x256xf32>
      %c0_39 = arith.constant 0 : index
      %c0_40 = arith.constant 0 : index
      %c0_41 = arith.constant 0 : index
      %59 = vector.load %arg11[%c0_39, %c0_40, %c0_41] : memref<1x32x256xf32, #tpu.memory_space<vmem>>, vector<1x32x256xf32>
      %60 = vector.shape_cast %59 : vector<1x32x256xf32> to vector<32x256xf32>
      %61 = vector.shape_cast %58 : vector<32x256xf32> to vector<1x32x256xf32>
      tpu.vector_store %arg11[%c0_39, %c0_40, %c0_41], %61 {strides = array<i32>} : memref<1x32x256xf32, #tpu.memory_space<vmem>>, vector<1x32x256xf32>,
    } else {
    }
    return
  }
  func.func @transform_0(%arg0: i32, %arg1: i32, %arg2: i32) -> (i32, i32, i32) {
    %c0_i32 = arith.constant 0 : i32
    %c0_i32_0 = arith.constant 0 : i32
    return %arg0, %c0_i32, %arg1 : i32, i32, i32
  }
  func.func @transform_1(%arg0: i32, %arg1: i32, %arg2: i32) -> (i32, i32, i32) {
    %c0_i32 = arith.constant 0 : i32
    %c0_i32_0 = arith.constant 0 : i32
    return %arg0, %arg2, %c0_i32 : i32, i32, i32
  }
  func.func @transform_2(%arg0: i32, %arg1: i32, %arg2: i32) -> (i32, i32, i32) {
    %c0_i32 = arith.constant 0 : i32
    %c0_i32_0 = arith.constant 0 : i32
    return %arg0, %c0_i32, %arg2 : i32, i32, i32
  }
  func.func @transform_3(%arg0: i32, %arg1: i32, %arg2: i32) -> (i32, i32, i32) {
    %c0_i32 = arith.constant 0 : i32
    %c0_i32_0 = arith.constant 0 : i32
    return %arg0, %c0_i32, %arg1 : i32, i32, i32
  }
  func.func @transform_4(%arg0: i32, %arg1: i32, %arg2: i32) -> (i32, i32, i32) {
    %c0_i32 = arith.constant 0 : i32
    %c0_i32_0 = arith.constant 0 : i32
    %c0_i32_1 = arith.constant 0 : i32
    return %arg0, %c0_i32, %c0_i32_0 : i32, i32, i32
  }
  func.func @transform_5(%arg0: i32, %arg1: i32, %arg2: i32) -> (i32, i32, i32) {
    %c0_i32 = arith.constant 0 : i32
    %c0_i32_0 = arith.constant 0 : i32
    %c0_i32_1 = arith.constant 0 : i32
    return %arg0, %c0_i32, %c0_i32_0 : i32, i32, i32
  }
  func.func @transform_6(%arg0: i32, %arg1: i32, %arg2: i32) -> (i32, i32) {
    %c0_i32 = arith.constant 0 : i32
    %c0_i32_0 = arith.constant 0 : i32
    %c0_i32_1 = arith.constant 0 : i32
    return %c0_i32, %c0_i32_0 : i32, i32
  }
  func.func @transform_7(%arg0: i32, %arg1: i32, %arg2: i32) -> (i32, i32) {
    %c0_i32 = arith.constant 0 : i32
    %c0_i32_0 = arith.constant 0 : i32
    %c0_i32_1 = arith.constant 0 : i32
    return %c0_i32, %c0_i32_0 : i32, i32
  }
  func.func @transform_8(%arg0: i32, %arg1: i32, %arg2: i32) -> (i32, i32, i32) {
    %c0_i32 = arith.constant 0 : i32
    %c0_i32_0 = arith.constant 0 : i32
    return %arg0, %c0_i32, %arg1 : i32, i32, i32
  }
}

</mosaic_0001>

<llo_original>
// kernel: adaattn_forward.1
$region0: #{adaattn_forward.1}
  #allocation0 [shape = 'u32[]', space=smem, size = 0x4, offset = 0x4, fixed_abs, tag = 'smem constant byte address 0x4 - core index']
  #allocation1 [shape = 'u32[144,128]{1,0:T(1,128)}', space=vmem, size = 0x12000, scoped, tag = 'internal scratch']
  #allocation2 [shape = 'bf16[32,256]{1,0:T(16,128)(2,1)}', space=vmem, size = 0x4000, scoped, tag = 'scratch operand']
  #allocation3 [shape = 'f32[1,256]{1,0:T(1,128)}', space=vmem, size = 0x400, scoped, tag = 'scratch operand']
  #allocation4 [shape = 'f32[1,256]{1,0:T(1,128)}', space=vmem, size = 0x400, scoped, tag = 'scratch operand']
  #allocation5 [shape = 'f32[64,256]{1,0:T(8,128)}', space=vmem, size = 0x10000, scoped, tag = 'scratch operand']
  %s0 = inlined_call_operand.vmem [shape: bf16[2,32,256], index: 0, kind: input, shape index: {}]
  %s1 = inlined_call_operand.vmem [shape: bf16[2,64,32], index: 1, kind: input, shape index: {}]
  %s2 = inlined_call_operand.vmem [shape: bf16[2,64,64], index: 2, kind: input, shape index: {}]
  %s3 = inlined_call_operand.vmem [shape: f32[2,32,256], index: 3, kind: input, shape index: {}]
  %s4 = inlined_call_operand.vmem [shape: f32[2,32,1], index: 4, kind: input, shape index: {}]
  %s5 = inlined_call_operand.vmem [shape: f32[2,32,1], index: 5, kind: input, shape index: {}]
  %s6 = inlined_call_operand.vmem [shape: bf16[32,32], index: 6, kind: input, shape index: {}]
  %s7 = inlined_call_operand.vmem [shape: f32[32,1], index: 7, kind: input, shape index: {}]
  %s8 = inlined_call_operand.vmem [shape: f32[2,32,256], index: 8, kind: output, shape index: {}]
  %s9 = sld [smem:[#allocation0]]
  $region73: #{adaattn_forward.1} parent=0
    _
  %s11 = ssub.s32 1, %s9
  %s12 = scalar_select 0, %s11, %s9
  loop: start=0, step=1, limit=4
  $region2: #{adaattn_forward.1} parent=0 // loop_pre_header
    _
  $region3: #{adaattn_forward.1} parent=0 // loop_header
    %s14 = sphi 0, %s18
    %p15 = scmp.ge.s32.totalorder %s14, 4
    %s21 = sphi 0, %s40
    %s22 = sphi 0, %s36
    %s23 = sphi 0, %s32
    %s24 = sphi 0, %s21
    %s25 = sphi 0, %s22
    %s26 = sphi 0, %s23
    %s27 = sphi 0, %s24
    %s28 = sphi 0, %s25
    %s29 = sphi 0, %s26
    %s45 = sphi 0, %s47
    %s48 = sphi 0, %s45
    %s49 = sphi 0, %s48
    %s65 = sphi 0, %s49
    %s73 = sphi 0, %s75
    %s76 = sphi 0, %s73
    %s77 = sphi 0, %s76
    %s93 = sphi 0, %s77
    %s101 = sphi 0, %s103
    %s104 = sphi 0, %s101
    %s105 = sphi 0, %s104
    %s121 = sphi 0, %s105
    %s129 = sphi 0, %s131
    %s132 = sphi 0, %s129
    %s133 = sphi 0, %s132
    %s149 = sphi 0, %s133
    %s155 = sphi 0, %s157
    %s158 = sphi 0, %s155
    %s159 = sphi 0, %s158
    %s175 = sphi 0, %s159
    %s181 = sphi 0, %s183
    %s184 = sphi 0, %s181
    %s185 = sphi 0, %s184
    %s201 = sphi 0, %s185
    %s205 = sphi 0, %s205
    %s207 = sphi 0, %s205
    %s208 = sphi 0, %s207
    %s222 = sphi 0, %s208
    %s226 = sphi 0, %s226
    %s228 = sphi 0, %s226
    %s229 = sphi 0, %s228
    %s243 = sphi 0, %s229
    %s251 = sphi 0, %s253
    %s254 = sphi 0, %s251
    %s255 = sphi 0, %s254
    %s271 = sphi 0, %s255
  $region4: #{adaattn_forward.1} parent=0 // loop_header_branch
    %17 = sbr.rel (%p15) target = $region8
  $region5: #{adaattn_forward.1} parent=0 // loop_body
    %s19 = ssub.s32 %s14, 1
    %s20 = ssub.s32 %s14, 2
    %s30 = sadd.s32 1, %s23
    %p31 = scmp.ge.s32.totalorder %s30, 1
    %s32 = scalar_select %p31, 0, %s30
    %s33 = sadd.s32 1, %s22
    %s34 = scalar_select %p31, %s33, %s22
    %p35 = scmp.ge.s32.totalorder %s34, 1
    %s36 = scalar_select %p35, 0, %s34
    %s37 = sadd.s32 1, %s21
    %s38 = scalar_select %p35, %s37, %s21
    %p39 = scmp.ge.s32.totalorder %s38, 2
    %s40 = scalar_select %p39, 0, %s38
    %s41 = ssub.s32 %s21, %s40
    %s42 = ssub.s32 %s22, %s36
    %s43 = sor.u32 %s41, %s42
    %p44 = scmp.eq.s32.totalorder %s43, 0
    %s46 = sadd.s32 %s45, 1
    %s47 = scalar_select %p44, %s45, %s46
    %p50 = pneg %p44
    %p51 = scmp.eq.s32.totalorder %s14, 1
    %p52 = por %p50, %p51
    %p53 = scmp.ne.s32.totalorder %s45, %s48
    %p54 = scmp.eq.s32.totalorder %s14, 0
    %p55 = por %p53, %p54
    %p56 = scmp.ne.s32.totalorder %s45, %s48
    %p57 = scmp.eq.s32.totalorder %s19, 1
    %p58 = por %p56, %p57
    %p59 = scmp.ne.s32.totalorder %s48, %s49
    %p60 = scmp.eq.s32.totalorder %s19, 0
    %p61 = por %p59, %p60
    %p62 = scmp.ne.s32.totalorder %s48, %s49
    %p63 = scmp.eq.s32.totalorder %s20, 1
    %p64 = por %p62, %p63
    %p66 = scmp.ne.s32.totalorder %s49, %s65
    %p67 = scmp.eq.s32.totalorder %s20, 0
    %p68 = por %p66, %p67
    %s69 = ssub.s32 %s21, %s40
    %s70 = ssub.s32 %s23, %s32
    %s71 = sor.u32 %s69, %s70
    %p72 = scmp.eq.s32.totalorder %s71, 0
    %s74 = sadd.s32 %s73, 1
    %s75 = scalar_select %p72, %s73, %s74
    %p78 = pneg %p72
    %p79 = scmp.eq.s32.totalorder %s14, 1
    %p80 = por %p78, %p79
    %p81 = scmp.ne.s32.totalorder %s73, %s76
    %p82 = scmp.eq.s32.totalorder %s14, 0
    %p83 = por %p81, %p82
    %p84 = scmp.ne.s32.totalorder %s73, %s76
    %p85 = scmp.eq.s32.totalorder %s19, 1
    %p86 = por %p84, %p85
    %p87 = scmp.ne.s32.totalorder %s76, %s77
    %p88 = scmp.eq.s32.totalorder %s19, 0
    %p89 = por %p87, %p88
    %p90 = scmp.ne.s32.totalorder %s76, %s77
    %p91 = scmp.eq.s32.totalorder %s20, 1
    %p92 = por %p90, %p91
    %p94 = scmp.ne.s32.totalorder %s77, %s93
    %p95 = scmp.eq.s32.totalorder %s20, 0
    %p96 = por %p94, %p95
    %s97 = ssub.s32 %s21, %s40
    %s98 = ssub.s32 %s23, %s32
    %s99 = sor.u32 %s97, %s98
    %p100 = scmp.eq.s32.totalorder %s99, 0
    %s102 = sadd.s32 %s101, 1
    %s103 = scalar_select %p100, %s101, %s102
    %p106 = pneg %p100
    %p107 = scmp.eq.s32.totalorder %s14, 1
    %p108 = por %p106, %p107
    %p109 = scmp.ne.s32.totalorder %s101, %s104
    %p110 = scmp.eq.s32.totalorder %s14, 0
    %p111 = por %p109, %p110
    %p112 = scmp.ne.s32.totalorder %s101, %s104
    %p113 = scmp.eq.s32.totalorder %s19, 1
    %p114 = por %p112, %p113
    %p115 = scmp.ne.s32.totalorder %s104, %s105
    %p116 = scmp.eq.s32.totalorder %s19, 0
    %p117 = por %p115, %p116
    %p118 = scmp.ne.s32.totalorder %s104, %s105
    %p119 = scmp.eq.s32.totalorder %s20, 1
    %p120 = por %p118, %p119
    %p122 = scmp.ne.s32.totalorder %s105, %s121
    %p123 = scmp.eq.s32.totalorder %s20, 0
    %p124 = por %p122, %p123
    %s125 = ssub.s32 %s21, %s40
    %s126 = ssub.s32 %s22, %s36
    %s127 = sor.u32 %s125, %s126
    %p128 = scmp.eq.s32.totalorder %s127, 0
    %s130 = sadd.s32 %s129, 1
    %s131 = scalar_select %p128, %s129, %s130
    %p134 = pneg %p128
    %p135 = scmp.eq.s32.totalorder %s14, 1
    %p136 = por %p134, %p135
    %p137 = scmp.ne.s32.totalorder %s129, %s132
    %p138 = scmp.eq.s32.totalorder %s14, 0
    %p139 = por %p137, %p138
    %p140 = scmp.ne.s32.totalorder %s129, %s132
    %p141 = scmp.eq.s32.totalorder %s19, 1
    %p142 = por %p140, %p141
    %p143 = scmp.ne.s32.totalorder %s132, %s133
    %p144 = scmp.eq.s32.totalorder %s19, 0
    %p145 = por %p143, %p144
    %p146 = scmp.ne.s32.totalorder %s132, %s133
    %p147 = scmp.eq.s32.totalorder %s20, 1
    %p148 = por %p146, %p147
    %p150 = scmp.ne.s32.totalorder %s133, %s149
    %p151 = scmp.eq.s32.totalorder %s20, 0
    %p152 = por %p150, %p151
    %s153 = ssub.s32 %s21, %s40
    %p154 = scmp.eq.s32.totalorder %s153, 0
    %s156 = sadd.s32 %s155, 1
    %s157 = scalar_select %p154, %s155, %s156
    %p160 = pneg %p154
    %p161 = scmp.eq.s32.totalorder %s14, 1
    %p162 = por %p160, %p161
    %p163 = scmp.ne.s32.totalorder %s155, %s158
    %p164 = scmp.eq.s32.totalorder %s14, 0
    %p165 = por %p163, %p164
    %p166 = scmp.ne.s32.totalorder %s155, %s158
    %p167 = scmp.eq.s32.totalorder %s19, 1
    %p168 = por %p166, %p167
    %p169 = scmp.ne.s32.totalorder %s158, %s159
    %p170 = scmp.eq.s32.totalorder %s19, 0
    %p171 = por %p169, %p170
    %p172 = scmp.ne.s32.totalorder %s158, %s159
    %p173 = scmp.eq.s32.totalorder %s20, 1
    %p174 = por %p172, %p173
    %p176 = scmp.ne.s32.totalorder %s159, %s175
    %p177 = scmp.eq.s32.totalorder %s20, 0
    %p178 = por %p176, %p177
    %s179 = ssub.s32 %s21, %s40
    %p180 = scmp.eq.s32.totalorder %s179, 0
    %s182 = sadd.s32 %s181, 1
    %s183 = scalar_select %p180, %s181, %s182
    %p186 = pneg %p180
    %p187 = scmp.eq.s32.totalorder %s14, 1
    %p188 = por %p186, %p187
    %p189 = scmp.ne.s32.totalorder %s181, %s184
    %p190 = scmp.eq.s32.totalorder %s14, 0
    %p191 = por %p189, %p190
    %p192 = scmp.ne.s32.totalorder %s181, %s184
    %p193 = scmp.eq.s32.totalorder %s19, 1
    %p194 = por %p192, %p193
    %p195 = scmp.ne.s32.totalorder %s184, %s185
    %p196 = scmp.eq.s32.totalorder %s19, 0
    %p197 = por %p195, %p196
    %p198 = scmp.ne.s32.totalorder %s184, %s185
    %p199 = scmp.eq.s32.totalorder %s20, 1
    %p200 = por %p198, %p199
    %p202 = scmp.ne.s32.totalorder %s185, %s201
    %p203 = scmp.eq.s32.totalorder %s20, 0
    %p204 = por %p202, %p203
    %s206 = sadd.s32 %s205, 1
    %p209 = scmp.eq.s32.totalorder %s14, 1
    %p210 = scmp.ne.s32.totalorder %s205, %s207
    %p211 = scmp.eq.s32.totalorder %s14, 0
    %p212 = por %p210, %p211
    %p213 = scmp.ne.s32.totalorder %s205, %s207
    %p214 = scmp.eq.s32.totalorder %s19, 1
    %p215 = por %p213, %p214
    %p216 = scmp.ne.s32.totalorder %s207, %s208
    %p217 = scmp.eq.s32.totalorder %s19, 0
    %p218 = por %p216, %p217
    %p219 = scmp.ne.s32.totalorder %s207, %s208
    %p220 = scmp.eq.s32.totalorder %s20, 1
    %p221 = por %p219, %p220
    %p223 = scmp.ne.s32.totalorder %s208, %s222
    %p224 = scmp.eq.s32.totalorder %s20, 0
    %p225 = por %p223, %p224
    %s227 = sadd.s32 %s226, 1
    %p230 = scmp.eq.s32.totalorder %s14, 1
    %p231 = scmp.ne.s32.totalorder %s226, %s228
    %p232 = scmp.eq.s32.totalorder %s14, 0
    %p233 = por %p231, %p232
    %p234 = scmp.ne.s32.totalorder %s226, %s228
    %p235 = scmp.eq.s32.totalorder %s19, 1
    %p236 = por %p234, %p235
    %p237 = scmp.ne.s32.totalorder %s228, %s229
    %p238 = scmp.eq.s32.totalorder %s19, 0
    %p239 = por %p237, %p238
    %p240 = scmp.ne.s32.totalorder %s228, %s229
    %p241 = scmp.eq.s32.totalorder %s20, 1
    %p242 = por %p240, %p241
    %p244 = scmp.ne.s32.totalorder %s229, %s243
    %p245 = scmp.eq.s32.totalorder %s20, 0
    %p246 = por %p244, %p245
    %s247 = ssub.s32 %s21, %s40
    %s248 = ssub.s32 %s22, %s36
    %s249 = sor.u32 %s247, %s248
    %p250 = scmp.eq.s32.totalorder %s249, 0
    %s252 = sadd.s32 %s251, 1
    %s253 = scalar_select %p250, %s251, %s252
    %p256 = pneg %p250
    %p257 = scmp.eq.s32.totalorder %s14, 1
    %p258 = por %p256, %p257
    %p259 = scmp.ne.s32.totalorder %s251, %s254
    %p260 = scmp.eq.s32.totalorder %s14, 0
    %p261 = por %p259, %p260
    %p262 = scmp.ne.s32.totalorder %s251, %s254
    %p263 = scmp.eq.s32.totalorder %s19, 1
    %p264 = por %p262, %p263
    %p265 = scmp.ne.s32.totalorder %s254, %s255
    %p266 = scmp.eq.s32.totalorder %s19, 0
    %p267 = por %p265, %p266
    %p268 = scmp.ne.s32.totalorder %s254, %s255
    %p269 = scmp.eq.s32.totalorder %s20, 1
    %p270 = por %p268, %p269
    %p272 = scmp.ne.s32.totalorder %s255, %s271
    %p273 = scmp.eq.s32.totalorder %s20, 0
    %p274 = por %p272, %p273
    %p275 = scmp.le.s32.totalorder 1, %s14
    %p276 = scmp.lt.s32.totalorder %s14, 3
    %p277 = pnand %p275, %p276
    %p278 = pneg %p277
    // Predicated region
    $region9: #{adaattn_forward.1} parent=5 // pred_check
      _
    $region10: #{adaattn_forward.1} parent=5 // pred_check_branch
      %280 = sbr.rel (%p277) target = $region12
    $region11: #{adaattn_forward.1} parent=5 // pred_region
      %s281 = ssub.s32 %s14, 1
      // Predicated region
      $region13: #{adaattn_forward.1} parent=11 // pred_check
        %p282 = pneg %p218
      $region14: #{adaattn_forward.1} parent=11 // pred_check_branch
        %284 = sbr.rel (%p282) target = $region16
      $region15: #{adaattn_forward.1} parent=11 // pred_region
        _
      $region16: #{adaattn_forward.1} parent=11 // pred_fallthru
        _
      // Predicated region
      $region17: #{adaattn_forward.1} parent=11 // pred_check
        %p285 = pneg %p239
      $region18: #{adaattn_forward.1} parent=11 // pred_check_branch
        %287 = sbr.rel (%p285) target = $region20
      $region19: #{adaattn_forward.1} parent=11 // pred_region
        _
      $region20: #{adaattn_forward.1} parent=11 // pred_fallthru
        _
    $region12: #{adaattn_forward.1} parent=5 // pred_fallthru
      _
    %p288 = scmp.lt.s32.totalorder %s14, 2
    // Predicated region
    $region21: #{adaattn_forward.1} parent=5 // pred_check
      %p289 = pneg %p288
    $region22: #{adaattn_forward.1} parent=5 // pred_check_branch
      %291 = sbr.rel (%p289) target = $region24
    $region23: #{adaattn_forward.1} parent=5 // pred_region
      // Predicated region
      $region25: #{adaattn_forward.1} parent=23 // pred_check
        %p292 = pneg %p55
      $region26: #{adaattn_forward.1} parent=23 // pred_check_branch
        %294 = sbr.rel (%p292) target = $region28
      $region27: #{adaattn_forward.1} parent=23 // pred_region
        %s295 = smul.u32 2, %s22
        %p296 = scmp.lt.s32.totalorder %s21, 1
        %s297 = scalar_select %p296, %s21, 1
        %p298 = scmp.lt.s32.totalorder %s295, 1
        %s299 = scalar_select %p298, %s295, 1
        %s300 = smul.addr %s297, 8
        %s301 = sadd.s32 %s299, %s300
        %s302 = smul.addr %s301, 4
        %s303 = scalar_lea.vmem %s0, %s302
        %s304 = smul.u32 2, %s22
      $region28: #{adaattn_forward.1} parent=23 // pred_fallthru
        _
      // Predicated region
      $region29: #{adaattn_forward.1} parent=23 // pred_check
        %p305 = pneg %p83
      $region30: #{adaattn_forward.1} parent=23 // pred_check_branch
        %307 = sbr.rel (%p305) target = $region32
      $region31: #{adaattn_forward.1} parent=23 // pred_region
        %s308 = smul.u32 8, %s23
        %p309 = scmp.lt.s32.totalorder %s21, 1
        %s310 = scalar_select %p309, %s21, 1
        %p311 = scmp.lt.s32.totalorder %s308, 7
        %s312 = scalar_select %p311, %s308, 7
        %s313 = smul.addr %s310, 8
        %s314 = sadd.s32 %s312, %s313
        %s315 = smul.addr %s314, 4
        %s316 = scalar_lea.vmem %s1, %s315
        %s317 = smul.u32 8, %s23
      $region32: #{adaattn_forward.1} parent=23 // pred_fallthru
        _
      // Predicated region
      $region33: #{adaattn_forward.1} parent=23 // pred_check
        %p318 = pneg %p111
      $region34: #{adaattn_forward.1} parent=23 // pred_check_branch
        %320 = sbr.rel (%p318) target = $region36
      $region35: #{adaattn_forward.1} parent=23 // pred_region
        %p321 = scmp.lt.s32.totalorder %s21, 1
        %s322 = scalar_select %p321, %s21, 1
        %p323 = scmp.lt.s32.totalorder %s23, 0
        %s324 = scalar_select %p323, %s23, 0
        %s325 = smul.addr %s322, 8
        %s326 = sadd.s32 %s324, %s325
        %s327 = smul.addr %s326, 4
        %s328 = scalar_lea.vmem %s2, %s327
      $region36: #{adaattn_forward.1} parent=23 // pred_fallthru
        _
      // Predicated region
      $region37: #{adaattn_forward.1} parent=23 // pred_check
        %p329 = pneg %p139
      $region38: #{adaattn_forward.1} parent=23 // pred_check_branch
        %331 = sbr.rel (%p329) target = $region40
      $region39: #{adaattn_forward.1} parent=23 // pred_region
        %s332 = smul.u32 2, %s22
        %p333 = scmp.lt.s32.totalorder %s21, 1
        %s334 = scalar_select %p333, %s21, 1
        %p335 = scmp.lt.s32.totalorder %s332, 1
        %s336 = scalar_select %p335, %s332, 1
        %s337 = smul.addr %s334, 8
        %s338 = sadd.s32 %s336, %s337
        %s339 = smul.addr %s338, 8
        %s340 = scalar_lea.vmem %s3, %s339
        %s341 = smul.u32 2, %s22
      $region40: #{adaattn_forward.1} parent=23 // pred_fallthru
        _
      // Predicated region
      $region41: #{adaattn_forward.1} parent=23 // pred_check
        %p342 = pneg %p165
      $region42: #{adaattn_forward.1} parent=23 // pred_check_branch
        %344 = sbr.rel (%p342) target = $region44
      $region43: #{adaattn_forward.1} parent=23 // pred_region
        %p345 = scmp.lt.s32.totalorder %s21, 1
        %s346 = scalar_select %p345, %s21, 1
        %s347 = smul.addr %s346, 4
        %s348 = smul.addr %s347, 8
        %s349 = scalar_lea.vmem %s4, %s348
      $region44: #{adaattn_forward.1} parent=23 // pred_fallthru
        _
      // Predicated region
      $region45: #{adaattn_forward.1} parent=23 // pred_check
        %p350 = pneg %p191
      $region46: #{adaattn_forward.1} parent=23 // pred_check_branch
        %352 = sbr.rel (%p350) target = $region48
      $region47: #{adaattn_forward.1} parent=23 // pred_region
        %p353 = scmp.lt.s32.totalorder %s21, 1
        %s354 = scalar_select %p353, %s21, 1
        %s355 = smul.addr %s354, 4
        %s356 = smul.addr %s355, 8
        %s357 = scalar_lea.vmem %s5, %s356
      $region48: #{adaattn_forward.1} parent=23 // pred_fallthru
        _
    $region24: #{adaattn_forward.1} parent=5 // pred_fallthru
      _
    %p358 = scmp.le.s32.totalorder 1, %s14
    %p359 = scmp.lt.s32.totalorder %s14, 3
    %p360 = pnand %p358, %p359
    %p361 = pneg %p360
    // Predicated region
    $region49: #{adaattn_forward.1} parent=5 // pred_check
      _
    $region50: #{adaattn_forward.1} parent=5 // pred_check_branch
      %363 = sbr.rel (%p360) target = $region52
    $region51: #{adaattn_forward.1} parent=5 // pred_region
      %s364 = ssub.s32 %s14, 1
      %s365 = smul.u32 2, %s25
      %p366 = scmp.lt.s32.totalorder %s24, 1
      %s367 = scalar_select %p366, %s24, 1
      %p368 = scmp.lt.s32.totalorder %s365, 1
      %s369 = scalar_select %p368, %s365, 1
      %s370 = smul.addr %s367, 8
      %s371 = sadd.s32 %s369, %s370
      %s372 = smul.addr %s371, 4
      %s373 = scalar_lea.vmem %s0, %s372
      %p374 = pneg %p61
      %p375 = pneg %p58
      %s376 = smul.u32 8, %s26
      %p377 = scmp.lt.s32.totalorder %s24, 1
      %s378 = scalar_select %p377, %s24, 1
      %p379 = scmp.lt.s32.totalorder %s376, 7
      %s380 = scalar_select %p379, %s376, 7
      %s381 = smul.addr %s378, 8
      %s382 = sadd.s32 %s380, %s381
      %s383 = smul.addr %s382, 4
      %s384 = scalar_lea.vmem %s1, %s383
      %p385 = pneg %p89
      %p386 = pneg %p86
      %p387 = scmp.lt.s32.totalorder %s24, 1
      %s388 = scalar_select %p387, %s24, 1
      %p389 = scmp.lt.s32.totalorder %s26, 0
      %s390 = scalar_select %p389, %s26, 0
      %s391 = smul.addr %s388, 8
      %s392 = sadd.s32 %s390, %s391
      %s393 = smul.addr %s392, 4
      %s394 = scalar_lea.vmem %s2, %s393
      %p395 = pneg %p117
      %p396 = pneg %p114
      %s397 = smul.u32 2, %s25
      %p398 = scmp.lt.s32.totalorder %s24, 1
      %s399 = scalar_select %p398, %s24, 1
      %p400 = scmp.lt.s32.totalorder %s397, 1
      %s401 = scalar_select %p400, %s397, 1
      %s402 = smul.addr %s399, 8
      %s403 = sadd.s32 %s401, %s402
      %s404 = smul.addr %s403, 8
      %s405 = scalar_lea.vmem %s3, %s404
      %p406 = pneg %p145
      %p407 = pneg %p142
      %p408 = scmp.lt.s32.totalorder %s24, 1
      %s409 = scalar_select %p408, %s24, 1
      %s410 = smul.addr %s409, 4
      %s411 = smul.addr %s410, 8
      %s412 = scalar_lea.vmem %s4, %s411
      %p413 = pneg %p171
      %p414 = pneg %p168
      %p415 = scmp.lt.s32.totalorder %s24, 1
      %s416 = scalar_select %p415, %s24, 1
      %s417 = smul.addr %s416, 4
      %s418 = smul.addr %s417, 8
      %s419 = scalar_lea.vmem %s5, %s418
      %p420 = pneg %p197
      %p421 = pneg %p194
      %p422 = pneg %p218
      %p423 = pneg %p215
      %p424 = pneg %p239
      %p425 = pneg %p236
      %p426 = pneg %p267
      %p427 = pneg %p264
      %s428 = smul.u32 2, %s25
      %p429 = scmp.lt.s32.totalorder %s24, 1
      %s430 = scalar_select %p429, %s24, 1
      %p431 = scmp.lt.s32.totalorder %s428, 1
      %s432 = scalar_select %p431, %s428, 1
      %s433 = smul.addr %s430, 8
      %s434 = sadd.s32 %s432, %s433
      %s435 = smul.addr %s434, 8
      %s436 = scalar_lea.vmem %s8, %s435
      %s437 = smul.u32 2, %s25
      %p438 = scmp.lt.s32.totalorder %s24, 1
      %s439 = scalar_select %p438, %s24, 1
      %p440 = scmp.lt.s32.totalorder %s437, 1
      %s441 = scalar_select %p440, %s437, 1
      %s442 = smul.addr %s439, 8
      %s443 = sadd.s32 %s441, %s442
      %s444 = smul.addr %s443, 4
      %s445 = scalar_lea.vmem %s0, %s444
      %s446 = smul.u32 2, %s25
      %s447 = smul.u32 8, %s26
      %p448 = scmp.lt.s32.totalorder %s24, 1
      %s449 = scalar_select %p448, %s24, 1
      %p450 = scmp.lt.s32.totalorder %s447, 7
      %s451 = scalar_select %p450, %s447, 7
      %s452 = smul.addr %s449, 8
      %s453 = sadd.s32 %s451, %s452
      %s454 = smul.addr %s453, 4
      %s455 = scalar_lea.vmem %s1, %s454
      %s456 = smul.u32 8, %s26
      %p457 = scmp.lt.s32.totalorder %s24, 1
      %s458 = scalar_select %p457, %s24, 1
      %p459 = scmp.lt.s32.totalorder %s26, 0
      %s460 = scalar_select %p459, %s26, 0
      %s461 = smul.addr %s458, 8
      %s462 = sadd.s32 %s460, %s461
      %s463 = smul.addr %s462, 4
      %s464 = scalar_lea.vmem %s2, %s463
      %s465 = smul.u32 2, %s25
      %p466 = scmp.lt.s32.totalorder %s24, 1
      %s467 = scalar_select %p466, %s24, 1
      %p468 = scmp.lt.s32.totalorder %s465, 1
      %s469 = scalar_select %p468, %s465, 1
      %s470 = smul.addr %s467, 8
      %s471 = sadd.s32 %s469, %s470
      %s472 = smul.addr %s471, 8
      %s473 = scalar_lea.vmem %s3, %s472
      %s474 = smul.u32 2, %s25
      %p475 = scmp.lt.s32.totalorder %s24, 1
      %s476 = scalar_select %p475, %s24, 1
      %s477 = smul.addr %s476, 4
      %s478 = smul.addr %s477, 8
      %s479 = scalar_lea.vmem %s4, %s478
      %p480 = scmp.lt.s32.totalorder %s24, 1
      %s481 = scalar_select %p480, %s24, 1
      %s482 = smul.addr %s481, 4
      %s483 = smul.addr %s482, 8
      %s484 = scalar_lea.vmem %s5, %s483
      %s485 = smul.u32 2, %s25
      %p486 = scmp.lt.s32.totalorder %s24, 1
      %s487 = scalar_select %p486, %s24, 1
      %p488 = scmp.lt.s32.totalorder %s485, 1
      %s489 = scalar_select %p488, %s485, 1
      %s490 = smul.addr %s487, 8
      %s491 = sadd.s32 %s489, %s490
      %s492 = smul.addr %s491, 8
      %s493 = scalar_lea.vmem %s8, %s492
      %s494 = smul.u32 2, %s25
      %p496 = scmp.eq.s32.totalorder %s26, 0
      // Predicated region
      $region53: #{adaattn_forward.1} parent=51 // pred_check
        %p497 = pneg %p496
      $region54: #{adaattn_forward.1} parent=51 // pred_check_branch
        %499 = sbr.rel (%p497) target = $region56
      $region55: #{adaattn_forward.1} parent=51 // pred_region
        %v500 = vld [vmem:[%s6] sm:$0xf]
        %v501 = vld [vmem:[%s6 + $0x4] sm:$0xf]
        %v502 = vld [vmem:[%s6 + $0x8] sm:$0xf]
        %v503 = vld [vmem:[%s6 + $0xc] sm:$0xf]
        %v504 = vld [vmem:[%s445] sm:$0xff]
        %v505 = vld [vmem:[%s445 + $0x8] sm:$0xff]
        %v506 = vld [vmem:[%s445 + $0x10] sm:$0xff]
        %v507 = vld [vmem:[%s445 + $0x18] sm:$0xff]
        %v508 = vld [vmem:[%s7] sm:$0xff]
        %v509 = vld [vmem:[%s7 + $0x8] sm:$0xff]
        %v510 = vld [vmem:[%s7 + $0x10] sm:$0xff]
        %v511 = vld [vmem:[%s7 + $0x18] sm:$0xff]
        %513 = vset.pattern.permute.xlu0 0
        %514 = vperm.xlu0 %513, %v508
        %v515 = vpop.permute.xlu0 %514
        %518 = vset.pattern.permute.xlu0 0
        %519 = vperm.xlu0 %518, %v509
        %v520 = vpop.permute.xlu0 %519
        %523 = vset.pattern.permute.xlu0 0
        %524 = vperm.xlu0 %523, %v510
        %v525 = vpop.permute.xlu0 %524
        %528 = vset.pattern.permute.xlu0 0
        %529 = vperm.xlu0 %528, %v511
        %v530 = vpop.permute.xlu0 %529
        %v536 = vunpack.c.l.b16 %v500
        %v537 = vunpack.c.l.b16 %v501
        %v538 = vunpack.c.l.b16 %v502
        %v539 = vunpack.c.l.b16 %v503
        %v540 = vpack.c.b16 %v537, %v536
        %v541 = vpack.c.b16 %v539, %v538
        %v546 = vunpack.c.l.b16 %v504
        %v547 = vunpack.c.h.b16 %v504
        %v548 = vunpack.c.l.b16 %v505
        %v549 = vunpack.c.h.b16 %v505
        %v550 = vunpack.c.l.b16 %v506
        %v551 = vunpack.c.h.b16 %v506
        %v552 = vunpack.c.l.b16 %v507
        %v553 = vunpack.c.h.b16 %v507
        %v554 = vpack.c.b16 %v548, %v546
        %v555 = vpack.c.b16 %v549, %v547
        %v556 = vpack.c.b16 %v552, %v550
        %v557 = vpack.c.b16 %v553, %v551
        %vm562 = vcmask 261120
        %v564 = vsel %vm562, %v540, 0
        %v567 = vsel %vm562, %v541, 0
        %569 = vmatprep.subr.bf16.mxu0 %v555
        %570 = vmatpush1.bf16.msra.mxu0 %v554
        %571 = vmatprep.subr.bf16.mxu0 %v557
        %572 = vmatpush1.bf16.msra.mxu0 %v556
        %573 = vmatprep.subr.bf16.mxu0 0
        %574 = vmatpush1.bf16.msra.mxu0 0
        %575 = vmatprep.subr.bf16.mxu0 0
        %576 = vmatpush1.bf16.msra.mxu0 0
        %577 = vmatprep.subr.bf16.mxu0 0
        %578 = vmatpush1.bf16.msra.mxu0 0
        %579 = vmatprep.subr.bf16.mxu0 0
        %580 = vmatpush1.bf16.msra.mxu0 0
        %581 = vmatprep.subr.bf16.mxu0 0
        %582 = vmatpush1.bf16.msra.mxu0 0
        %583 = vmatprep.subr.bf16.mxu0 0
        %584 = vmatpush1.bf16.msra.mxu0 0
        %585 = vmatprep.subr.bf16.mxu0 0
        %586 = vmatpush1.bf16.msra.mxu0 0
        %587 = vmatprep.subr.bf16.mxu0 0
        %588 = vmatpush1.bf16.msra.mxu0 0
        %589 = vmatprep.subr.bf16.mxu0 0
        %590 = vmatpush1.bf16.msra.mxu0 0
        %591 = vmatprep.subr.bf16.mxu0 0
        %592 = vmatpush1.bf16.msra.mxu0 0
        %593 = vmatprep.subr.bf16.mxu0 0
        %594 = vmatpush1.bf16.msra.mxu0 0
        %595 = vmatprep.subr.bf16.mxu0 0
        %596 = vmatpush1.bf16.msra.mxu0 0
        %597 = vmatprep.subr.bf16.mxu0 0
        %598 = vmatpush1.bf16.msra.mxu0 0
        %599 = vmatprep.subr.bf16.mxu0 0
        %600 = vmatpush1.bf16.msra.mxu0 0
        %601 = vmatprep.mubr.bf16.mxu0 0
        %602 = vmatmul.mubr.bf16.gmra.mrb[0].mxu0 %v564
        %v603 = vpop.f32.mrb[0].mxu0
        %v604 = vadd.f32 %v515, %v603
        %v605 = vpop.f32.mrb[0].mxu0
        %v606 = vadd.f32 %v515, %v605
        %v607 = vpop.f32.mrb[0].mxu0
        %v608 = vadd.f32 %v520, %v607
        %v609 = vpop.f32.mrb[0].mxu0
        %v610 = vadd.f32 %v520, %v609
        %611 = vmatprep.mubr.bf16.mxu0 0
        %612 = vmatmul.mubr.bf16.gmra.mrb[0].mxu0 %v567
        %v613 = vpop.f32.mrb[0].mxu0
        %v614 = vadd.f32 %v525, %v613
        %v615 = vpop.f32.mrb[0].mxu0
        %v616 = vadd.f32 %v525, %v615
        %v617 = vpop.f32.mrb[0].mxu0
        %v618 = vadd.f32 %v530, %v617
        %v619 = vpop.f32.mrb[0].mxu0
        %v620 = vadd.f32 %v530, %v619
        %621 = vdwg.mxu0
        %v622 = vpack.c.bf16 %v608, %v604
        %v623 = vpack.c.bf16 %v610, %v606
        %v624 = vpack.c.bf16 %v618, %v614
        %v625 = vpack.c.bf16 %v620, %v616
        %626 = vst [vmem:[#allocation2] sm:$0xff] %v622
        %627 = vst [vmem:[#allocation2 + $0x8] sm:$0xff] %v623
        %628 = vst [vmem:[#allocation2 + $0x10] sm:$0xff] %v624
        %629 = vst [vmem:[#allocation2 + $0x18] sm:$0xff] %v625
        %v630 = vlaneseq
        %vm631 = vcmp.ge.s32.totalorder %v630, 0
        %vm632 = vcmp.lt.s32.totalorder %v630, 256
        %vm633 = vmand %vm631, %vm632
        %634 = vst.msk [vmem:[#allocation3] sm:$0x3] %vm633, -inf
        %635 = vst.msk [vmem:[#allocation4] sm:$0x3] %vm633, 0.0
        %636 = vst [vmem:[#allocation5] sm:$0xff] 0.0
        %637 = vst [vmem:[#allocation5 + $0x8] sm:$0xff] 0.0
        %638 = vst [vmem:[#allocation5 + $0x10] sm:$0xff] 0.0
        %639 = vst [vmem:[#allocation5 + $0x18] sm:$0xff] 0.0
        %640 = vst [vmem:[#allocation5 + $0x20] sm:$0xff] 0.0
        %641 = vst [vmem:[#allocation5 + $0x28] sm:$0xff] 0.0
        %642 = vst [vmem:[#allocation5 + $0x30] sm:$0xff] 0.0
        %643 = vst [vmem:[#allocation5 + $0x38] sm:$0xff] 0.0
        %644 = vst [vmem:[#allocation5 + $0x40] sm:$0xff] 0.0
        %645 = vst [vmem:[#allocation5 + $0x48] sm:$0xff] 0.0
        %646 = vst [vmem:[#allocation5 + $0x50] sm:$0xff] 0.0
        %647 = vst [vmem:[#allocation5 + $0x58] sm:$0xff] 0.0
        %648 = vst [vmem:[#allocation5 + $0x60] sm:$0xff] 0.0
        %649 = vst [vmem:[#allocation5 + $0x68] sm:$0xff] 0.0
        %650 = vst [vmem:[#allocation5 + $0x70] sm:$0xff] 0.0
        %651 = vst [vmem:[#allocation5 + $0x78] sm:$0xff] 0.0
      $region56: #{adaattn_forward.1} parent=51 // pred_fallthru
        _
      %v652 = vld [vmem:[%s455] sm:$0xf]
      %v653 = vld [vmem:[%s455 + $0x4] sm:$0xf]
      %v654 = vld [vmem:[%s455 + $0x8] sm:$0xf]
      %v655 = vld [vmem:[%s455 + $0xc] sm:$0xf]
      %v656 = vld [vmem:[%s455 + $0x10] sm:$0xf]
      %v657 = vld [vmem:[%s455 + $0x14] sm:$0xf]
      %v658 = vld [vmem:[%s455 + $0x18] sm:$0xf]
      %v659 = vld [vmem:[%s455 + $0x1c] sm:$0xf]
      %v660 = vld [vmem:[#allocation2] sm:$0xff]
      %v661 = vld [vmem:[#allocation2 + $0x8] sm:$0xff]
      %v662 = vld [vmem:[#allocation2 + $0x10] sm:$0xff]
      %v663 = vld [vmem:[#allocation2 + $0x18] sm:$0xff]
      %v672 = vunpack.c.l.b16 %v652
      %v673 = vunpack.c.l.b16 %v653
      %v674 = vunpack.c.l.b16 %v654
      %v675 = vunpack.c.l.b16 %v655
      %v676 = vunpack.c.l.b16 %v656
      %v677 = vunpack.c.l.b16 %v657
      %v678 = vunpack.c.l.b16 %v658
      %v679 = vunpack.c.l.b16 %v659
      %v680 = vpack.c.b16 %v673, %v672
      %v681 = vpack.c.b16 %v675, %v674
      %v682 = vpack.c.b16 %v677, %v676
      %v683 = vpack.c.b16 %v679, %v678
      %vm684 = vcmask 261120
      %v686 = vsel %vm684, %v680, 0
      %v689 = vsel %vm684, %v681, 0
      %v692 = vsel %vm684, %v682, 0
      %v695 = vsel %vm684, %v683, 0
      %697 = vmatprep.subr.bf16.mxu0 %v661
      %698 = vmatpush1.bf16.msra.mxu0 %v660
      %699 = vmatprep.subr.bf16.mxu0 %v663
      %700 = vmatpush1.bf16.msra.mxu0 %v662
      %701 = vmatprep.subr.bf16.mxu0 0
      %702 = vmatpush1.bf16.msra.mxu0 0
      %703 = vmatprep.subr.bf16.mxu0 0
      %704 = vmatpush1.bf16.msra.mxu0 0
      %705 = vmatprep.subr.bf16.mxu0 0
      %706 = vmatpush1.bf16.msra.mxu0 0
      %707 = vmatprep.subr.bf16.mxu0 0
      %708 = vmatpush1.bf16.msra.mxu0 0
      %709 = vmatprep.subr.bf16.mxu0 0
      %710 = vmatpush1.bf16.msra.mxu0 0
      %711 = vmatprep.subr.bf16.mxu0 0
      %712 = vmatpush1.bf16.msra.mxu0 0
      %713 = vmatprep.subr.bf16.mxu0 0
      %714 = vmatpush1.bf16.msra.mxu0 0
      %715 = vmatprep.subr.bf16.mxu0 0
      %716 = vmatpush1.bf16.msra.mxu0 0
      %717 = vmatprep.subr.bf16.mxu0 0
      %718 = vmatpush1.bf16.msra.mxu0 0
      %719 = vmatprep.subr.bf16.mxu0 0
      %720 = vmatpush1.bf16.msra.mxu0 0
      %721 = vmatprep.subr.bf16.mxu0 0
      %722 = vmatpush1.bf16.msra.mxu0 0
      %723 = vmatprep.subr.bf16.mxu0 0
      %724 = vmatpush1.bf16.msra.mxu0 0
      %725 = vmatprep.subr.bf16.mxu0 0
      %726 = vmatpush1.bf16.msra.mxu0 0
      %727 = vmatprep.subr.bf16.mxu0 0
      %728 = vmatpush1.bf16.msra.mxu0 0
      %729 = vmatprep.mubr.bf16.mxu0 0
      %730 = vmatmul.mubr.bf16.gmra.mrb[0].mxu0 %v686
      %v731 = vpop.f32.mrb[0].mxu0
      %v732 = vadd.f32 0.0, %v731
      %v733 = vpop.f32.mrb[0].mxu0
      %v734 = vadd.f32 0.0, %v733
      %v735 = vpop.f32.mrb[0].mxu0
      %v736 = vadd.f32 0.0, %v735
      %v737 = vpop.f32.mrb[0].mxu0
      %v738 = vadd.f32 0.0, %v737
      %739 = vmatprep.mubr.bf16.mxu0 0
      %740 = vmatmul.mubr.bf16.gmra.mrb[0].mxu0 %v689
      %v741 = vpop.f32.mrb[0].mxu0
      %v742 = vadd.f32 0.0, %v741
      %v743 = vpop.f32.mrb[0].mxu0
      %v744 = vadd.f32 0.0, %v743
      %v745 = vpop.f32.mrb[0].mxu0
      %v746 = vadd.f32 0.0, %v745
      %v747 = vpop.f32.mrb[0].mxu0
      %v748 = vadd.f32 0.0, %v747
      %749 = vmatprep.mubr.bf16.mxu0 0
      %750 = vmatmul.mubr.bf16.gmra.mrb[0].mxu0 %v692
      %v751 = vpop.f32.mrb[0].mxu0
      %v752 = vadd.f32 0.0, %v751
      %v753 = vpop.f32.mrb[0].mxu0
      %v754 = vadd.f32 0.0, %v753
      %v755 = vpop.f32.mrb[0].mxu0
      %v756 = vadd.f32 0.0, %v755
      %v757 = vpop.f32.mrb[0].mxu0
      %v758 = vadd.f32 0.0, %v757
      %759 = vmatprep.mubr.bf16.mxu0 0
      %760 = vmatmul.mubr.bf16.gmra.mrb[0].mxu0 %v695
      %v761 = vpop.f32.mrb[0].mxu0
      %v762 = vadd.f32 0.0, %v761
      %v763 = vpop.f32.mrb[0].mxu0
      %v764 = vadd.f32 0.0, %v763
      %v765 = vpop.f32.mrb[0].mxu0
      %v766 = vadd.f32 0.0, %v765
      %v767 = vpop.f32.mrb[0].mxu0
      %v768 = vadd.f32 0.0, %v767
      %769 = vdwg.mxu0
      %v770 = vld [vmem:[#allocation3] sm:$0x3]
      %v771 = vmax.f32 %v732, %v742
      %v772 = vmax.f32 %v736, %v746
      %v773 = vmax.f32 %v771, %v752
      %v774 = vmax.f32 %v772, %v756
      %v775 = vmax.f32 %v773, %v762
      %v776 = vmax.f32 %v774, %v766
      %v777 = vmax.f32 %v775, %v776
      %v778 = vrot.slane %v777, 4
      %v779 = vmax.f32 %v777, %v778
      %v780 = vrot.slane %v779, 2
      %v781 = vmax.f32 %v779, %v780
      %v782 = vrot.slane %v781, 1
      %v783 = vmax.f32 %v781, %v782
      %v784 = vmax.f32 %v734, %v744
      %v785 = vmax.f32 %v738, %v748
      %v786 = vmax.f32 %v784, %v754
      %v787 = vmax.f32 %v785, %v758
      %v788 = vmax.f32 %v786, %v764
      %v789 = vmax.f32 %v787, %v768
      %v790 = vmax.f32 %v788, %v789
      %v791 = vrot.slane %v790, 4
      %v792 = vmax.f32 %v790, %v791
      %v793 = vrot.slane %v792, 2
      %v794 = vmax.f32 %v792, %v793
      %v795 = vrot.slane %v794, 1
      %v796 = vmax.f32 %v794, %v795
      %v799 = vcombine.low %v783, %v796
      %v801 = vunpack.c.l.s4 1966171168
      %v802 = vunpack.c.0.s8 %v801
      %v803 = vlaneseq
      %v804 = vshrl.u32 %v803, 7
      %v805 = vsub.s32 %v802, %v804
      %v806 = vrot.slane %v799, %v805
      %v808 = vunpack.c.l.s4 1966171168
      %v809 = vunpack.c.0.s8 %v808
      %v810 = vlaneseq
      %v811 = vshrl.u32 %v810, 7
      %v812 = vsub.s32 %v809, %v811
      %v813 = vrot.slane %v806, %v812
      %v815 = vmax.f32 %v770, %v813
      %v816 = vsub.f32 %v770, %v815
      %v817 = vmul.f32 %v816, 1.442695
      %v818 = vpow.pop %v817
      %v820 = vlaneseq
      %v821 = vshrl.u32 %v820, 7
      %v822 = vsub.s32 0, %v821
      %v823 = vrot.slane %v815, %v822
      %v824 = vlaneseq
      %v825 = vshrl.u32 %v824, 7
      %v826 = vsub.s32 1, %v825
      %v827 = vrot.slane %v815, %v826
      %v830 = vsub.f32 %v732, %v823
      %v831 = vsub.f32 %v734, %v827
      %v832 = vsub.f32 %v736, %v823
      %v833 = vsub.f32 %v738, %v827
      %v834 = vsub.f32 %v742, %v823
      %v835 = vsub.f32 %v744, %v827
      %v836 = vsub.f32 %v746, %v823
      %v837 = vsub.f32 %v748, %v827
      %v838 = vsub.f32 %v752, %v823
      %v839 = vsub.f32 %v754, %v827
      %v840 = vsub.f32 %v756, %v823
      %v841 = vsub.f32 %v758, %v827
      %v842 = vsub.f32 %v762, %v823
      %v843 = vsub.f32 %v764, %v827
      %v844 = vsub.f32 %v766, %v823
      %v845 = vsub.f32 %v768, %v827
      %v846 = vmul.f32 %v830, 1.442695
      %v847 = vpow.pop %v846
      %v848 = vmul.f32 %v831, 1.442695
      %v849 = vpow.pop %v848
      %v850 = vmul.f32 %v832, 1.442695
      %v851 = vpow.pop %v850
      %v852 = vmul.f32 %v833, 1.442695
      %v853 = vpow.pop %v852
      %v854 = vmul.f32 %v834, 1.442695
      %v855 = vpow.pop %v854
      %v856 = vmul.f32 %v835, 1.442695
      %v857 = vpow.pop %v856
      %v858 = vmul.f32 %v836, 1.442695
      %v859 = vpow.pop %v858
      %v860 = vmul.f32 %v837, 1.442695
      %v861 = vpow.pop %v860
      %v862 = vmul.f32 %v838, 1.442695
      %v863 = vpow.pop %v862
      %v864 = vmul.f32 %v839, 1.442695
      %v865 = vpow.pop %v864
      %v866 = vmul.f32 %v840, 1.442695
      %v867 = vpow.pop %v866
      %v868 = vmul.f32 %v841, 1.442695
      %v869 = vpow.pop %v868
      %v870 = vmul.f32 %v842, 1.442695
      %v871 = vpow.pop %v870
      %v872 = vmul.f32 %v843, 1.442695
      %v873 = vpow.pop %v872
      %v874 = vmul.f32 %v844, 1.442695
      %v875 = vpow.pop %v874
      %v876 = vmul.f32 %v845, 1.442695
      %v877 = vpow.pop %v876
      %v878 = vld [vmem:[#allocation4] sm:$0x3]
      %v879 = vmul.f32 %v818, %v878
      %v880 = vadd.f32 %v847, %v851
      %v881 = vadd.f32 %v880, %v855
      %v882 = vadd.f32 %v881, %v859
      %v883 = vadd.f32 %v882, %v863
      %v884 = vadd.f32 %v883, %v867
      %v885 = vadd.f32 %v884, %v871
      %v886 = vadd.f32 %v885, %v875
      %v887 = vrot.slane %v886, 4
      %v888 = vadd.f32 %v886, %v887
      %v889 = vrot.slane %v888, 2
      %v890 = vadd.f32 %v888, %v889
      %v891 = vrot.slane %v890, 1
      %v892 = vadd.f32 %v890, %v891
      %v893 = vadd.f32 %v849, %v853
      %v894 = vadd.f32 %v893, %v857
      %v895 = vadd.f32 %v894, %v861
      %v896 = vadd.f32 %v895, %v865
      %v897 = vadd.f32 %v896, %v869
      %v898 = vadd.f32 %v897, %v873
      %v899 = vadd.f32 %v898, %v877
      %v900 = vrot.slane %v899, 4
      %v901 = vadd.f32 %v899, %v900
      %v902 = vrot.slane %v901, 2
      %v903 = vadd.f32 %v901, %v902
      %v904 = vrot.slane %v903, 1
      %v905 = vadd.f32 %v903, %v904
      %v908 = vcombine.low %v892, %v905
      %v910 = vunpack.c.l.s4 1966171168
      %v911 = vunpack.c.0.s8 %v910
      %v912 = vlaneseq
      %v913 = vshrl.u32 %v912, 7
      %v914 = vsub.s32 %v911, %v913
      %v915 = vrot.slane %v908, %v914
      %v917 = vunpack.c.l.s4 1966171168
      %v918 = vunpack.c.0.s8 %v917
      %v919 = vlaneseq
      %v920 = vshrl.u32 %v919, 7
      %v921 = vsub.s32 %v918, %v920
      %v922 = vrot.slane %v915, %v921
      %v924 = vadd.f32 %v879, %v922
      %v925 = vlaneseq
      %vm926 = vcmp.ge.s32.totalorder %v925, 0
      %vm927 = vcmp.lt.s32.totalorder %v925, 256
      %vm928 = vmand %vm926, %vm927
      %929 = vst.msk [vmem:[#allocation4] sm:$0x3] %vm928, %v924
      %v930 = vld [vmem:[#allocation5] sm:$0xff]
      %v931 = vld [vmem:[#allocation5 + $0x8] sm:$0xff]
      %v932 = vld [vmem:[#allocation5 + $0x10] sm:$0xff]
      %v933 = vld [vmem:[#allocation5 + $0x18] sm:$0xff]
      %v934 = vld [vmem:[#allocation5 + $0x20] sm:$0xff]
      %v935 = vld [vmem:[#allocation5 + $0x28] sm:$0xff]
      %v936 = vld [vmem:[#allocation5 + $0x30] sm:$0xff]
      %v937 = vld [vmem:[#allocation5 + $0x38] sm:$0xff]
      %v938 = vld [vmem:[#allocation5 + $0x40] sm:$0xff]
      %v939 = vld [vmem:[#allocation5 + $0x48] sm:$0xff]
      %v940 = vld [vmem:[#allocation5 + $0x50] sm:$0xff]
      %v941 = vld [vmem:[#allocation5 + $0x58] sm:$0xff]
      %v942 = vld [vmem:[#allocation5 + $0x60] sm:$0xff]
      %v943 = vld [vmem:[#allocation5 + $0x68] sm:$0xff]
      %v944 = vld [vmem:[#allocation5 + $0x70] sm:$0xff]
      %v945 = vld [vmem:[#allocation5 + $0x78] sm:$0xff]
      %v947 = vlaneseq
      %v948 = vshrl.u32 %v947, 7
      %v949 = vsub.s32 0, %v948
      %v950 = vrot.slane %v818, %v949
      %v951 = vlaneseq
      %v952 = vshrl.u32 %v951, 7
      %v953 = vsub.s32 1, %v952
      %v954 = vrot.slane %v818, %v953
      %v957 = vmul.f32 %v950, %v930
      %v958 = vmul.f32 %v954, %v931
      %v959 = vmul.f32 %v950, %v932
      %v960 = vmul.f32 %v954, %v933
      %v961 = vmul.f32 %v950, %v934
      %v962 = vmul.f32 %v954, %v935
      %v963 = vmul.f32 %v950, %v936
      %v964 = vmul.f32 %v954, %v937
      %v965 = vmul.f32 %v950, %v938
      %v966 = vmul.f32 %v954, %v939
      %v967 = vmul.f32 %v950, %v940
      %v968 = vmul.f32 %v954, %v941
      %v969 = vmul.f32 %v950, %v942
      %v970 = vmul.f32 %v954, %v943
      %v971 = vmul.f32 %v950, %v944
      %v972 = vmul.f32 %v954, %v945
      %v973 = vld [vmem:[%s464] sm:$0xf]
      %v974 = vld [vmem:[%s464 + $0x4] sm:$0xf]
      %v975 = vld [vmem:[%s464 + $0x8] sm:$0xf]
      %v976 = vld [vmem:[%s464 + $0xc] sm:$0xf]
      %v977 = vld [vmem:[%s464 + $0x10] sm:$0xf]
      %v978 = vld [vmem:[%s464 + $0x14] sm:$0xf]
      %v979 = vld [vmem:[%s464 + $0x18] sm:$0xf]
      %v980 = vld [vmem:[%s464 + $0x1c] sm:$0xf]
      %v981 = vpack.c.bf16 %v851, %v847
      %v982 = vpack.c.bf16 %v853, %v849
      %v983 = vpack.c.bf16 %v859, %v855
      %v984 = vpack.c.bf16 %v861, %v857
      %v985 = vpack.c.bf16 %v867, %v863
      %v986 = vpack.c.bf16 %v869, %v865
      %v987 = vpack.c.bf16 %v875, %v871
      %v988 = vpack.c.bf16 %v877, %v873
      %v997 = vunpack.c.l.b16 %v973
      %v998 = vunpack.c.l.b16 %v974
      %v999 = vunpack.c.l.b16 %v975
      %v1000 = vunpack.c.l.b16 %v976
      %v1001 = vunpack.c.l.b16 %v977
      %v1002 = vunpack.c.l.b16 %v978
      %v1003 = vunpack.c.l.b16 %v979
      %v1004 = vunpack.c.l.b16 %v980
      %v1005 = vpack.c.b16 %v998, %v997
      %v1006 = vpack.c.b16 %v1000, %v999
      %v1007 = vpack.c.b16 %v1002, %v1001
      %v1008 = vpack.c.b16 %v1004, %v1003
      %vm1009 = vcmask 523264
      %v1011 = vsel %vm1009, %v1005, 0
      %v1014 = vsel %vm1009, %v1006, 0
      %v1017 = vsel %vm1009, %v1007, 0
      %v1020 = vsel %vm1009, %v1008, 0
      %1022 = vmatprep.subr.bf16.mxu0 %v982
      %1023 = vmatpush1.bf16.msra.mxu0 %v981
      %1024 = vmatprep.subr.bf16.mxu0 %v984
      %1025 = vmatpush1.bf16.msra.mxu0 %v983
      %1026 = vmatprep.subr.bf16.mxu0 %v986
      %1027 = vmatpush1.bf16.msra.mxu0 %v985
      %1028 = vmatprep.subr.bf16.mxu0 %v988
      %1029 = vmatpush1.bf16.msra.mxu0 %v987
      %1030 = vmatprep.subr.bf16.mxu0 0
      %1031 = vmatpush1.bf16.msra.mxu0 0
      %1032 = vmatprep.subr.bf16.mxu0 0
      %1033 = vmatpush1.bf16.msra.mxu0 0
      %1034 = vmatprep.subr.bf16.mxu0 0
      %1035 = vmatpush1.bf16.msra.mxu0 0
      %1036 = vmatprep.subr.bf16.mxu0 0
      %1037 = vmatpush1.bf16.msra.mxu0 0
      %1038 = vmatprep.subr.bf16.mxu0 0
      %1039 = vmatpush1.bf16.msra.mxu0 0
      %1040 = vmatprep.subr.bf16.mxu0 0
      %1041 = vmatpush1.bf16.msra.mxu0 0
      %1042 = vmatprep.subr.bf16.mxu0 0
      %1043 = vmatpush1.bf16.msra.mxu0 0
      %1044 = vmatprep.subr.bf16.mxu0 0
      %1045 = vmatpush1.bf16.msra.mxu0 0
      %1046 = vmatprep.subr.bf16.mxu0 0
      %1047 = vmatpush1.bf16.msra.mxu0 0
      %1048 = vmatprep.subr.bf16.mxu0 0
      %1049 = vmatpush1.bf16.msra.mxu0 0
      %1050 = vmatprep.subr.bf16.mxu0 0
      %1051 = vmatpush1.bf16.msra.mxu0 0
      %1052 = vmatprep.subr.bf16.mxu0 0
      %1053 = vmatpush1.bf16.msra.mxu0 0
      %1054 = vmatprep.mubr.bf16.mxu0 0
      %1055 = vmatmul.mubr.bf16.gmra.mrb[0].mxu0 %v1011
      %v1056 = vpop.f32.mrb[0].mxu0
      %v1057 = vadd.f32 0.0, %v1056
      %v1058 = vpop.f32.mrb[0].mxu0
      %v1059 = vadd.f32 0.0, %v1058
      %v1060 = vpop.f32.mrb[0].mxu0
      %v1061 = vadd.f32 0.0, %v1060
      %v1062 = vpop.f32.mrb[0].mxu0
      %v1063 = vadd.f32 0.0, %v1062
      %1064 = vmatprep.mubr.bf16.mxu0 0
      %1065 = vmatmul.mubr.bf16.gmra.mrb[0].mxu0 %v1014
      %v1066 = vpop.f32.mrb[0].mxu0
      %v1067 = vadd.f32 0.0, %v1066
      %v1068 = vpop.f32.mrb[0].mxu0
      %v1069 = vadd.f32 0.0, %v1068
      %v1070 = vpop.f32.mrb[0].mxu0
      %v1071 = vadd.f32 0.0, %v1070
      %v1072 = vpop.f32.mrb[0].mxu0
      %v1073 = vadd.f32 0.0, %v1072
      %1074 = vmatprep.mubr.bf16.mxu0 0
      %1075 = vmatmul.mubr.bf16.gmra.mrb[0].mxu0 %v1017
      %v1076 = vpop.f32.mrb[0].mxu0
      %v1077 = vadd.f32 0.0, %v1076
      %v1078 = vpop.f32.mrb[0].mxu0
      %v1079 = vadd.f32 0.0, %v1078
      %v1080 = vpop.f32.mrb[0].mxu0
      %v1081 = vadd.f32 0.0, %v1080
      %v1082 = vpop.f32.mrb[0].mxu0
      %v1083 = vadd.f32 0.0, %v1082
      %1084 = vmatprep.mubr.bf16.mxu0 0
      %1085 = vmatmul.mubr.bf16.gmra.mrb[0].mxu0 %v1020
      %v1086 = vpop.f32.mrb[0].mxu0
      %v1087 = vadd.f32 0.0, %v1086
      %v1088 = vpop.f32.mrb[0].mxu0
      %v1089 = vadd.f32 0.0, %v1088
      %v1090 = vpop.f32.mrb[0].mxu0
      %v1091 = vadd.f32 0.0, %v1090
      %v1092 = vpop.f32.mrb[0].mxu0
      %v1093 = vadd.f32 0.0, %v1092
      %1094 = vdwg.mxu0
      %v1095 = vadd.f32 %v957, %v1057
      %v1096 = vadd.f32 %v958, %v1059
      %v1097 = vadd.f32 %v959, %v1061
      %v1098 = vadd.f32 %v960, %v1063
      %v1099 = vadd.f32 %v961, %v1067
      %v1100 = vadd.f32 %v962, %v1069
      %v1101 = vadd.f32 %v963, %v1071
      %v1102 = vadd.f32 %v964, %v1073
      %v1103 = vadd.f32 %v965, %v1077
      %v1104 = vadd.f32 %v966, %v1079
      %v1105 = vadd.f32 %v967, %v1081
      %v1106 = vadd.f32 %v968, %v1083
      %v1107 = vadd.f32 %v969, %v1087
      %v1108 = vadd.f32 %v970, %v1089
      %v1109 = vadd.f32 %v971, %v1091
      %v1110 = vadd.f32 %v972, %v1093
      %1111 = vst [vmem:[#allocation5] sm:$0xff] %v1095
      %1112 = vst [vmem:[#allocation5 + $0x8] sm:$0xff] %v1096
      %1113 = vst [vmem:[#allocation5 + $0x10] sm:$0xff] %v1097
      %1114 = vst [vmem:[#allocation5 + $0x18] sm:$0xff] %v1098
      %1115 = vst [vmem:[#allocation5 + $0x20] sm:$0xff] %v1099
      %1116 = vst [vmem:[#allocation5 + $0x28] sm:$0xff] %v1100
      %1117 = vst [vmem:[#allocation5 + $0x30] sm:$0xff] %v1101
      %1118 = vst [vmem:[#allocation5 + $0x38] sm:$0xff] %v1102
      %1119 = vst [vmem:[#allocation5 + $0x40] sm:$0xff] %v1103
      %1120 = vst [vmem:[#allocation5 + $0x48] sm:$0xff] %v1104
      %1121 = vst [vmem:[#allocation5 + $0x50] sm:$0xff] %v1105
      %1122 = vst [vmem:[#allocation5 + $0x58] sm:$0xff] %v1106
      %1123 = vst [vmem:[#allocation5 + $0x60] sm:$0xff] %v1107
      %1124 = vst [vmem:[#allocation5 + $0x68] sm:$0xff] %v1108
      %1125 = vst [vmem:[#allocation5 + $0x70] sm:$0xff] %v1109
      %1126 = vst [vmem:[#allocation5 + $0x78] sm:$0xff] %v1110
      %1127 = vst.msk [vmem:[#allocation3] sm:$0x3] %vm928, %v815
      // Predicated region
      $region57: #{adaattn_forward.1} parent=51 // pred_check
        %p1128 = pneg %p496
      $region58: #{adaattn_forward.1} parent=51 // pred_check_branch
        %1130 = sbr.rel (%p1128) target = $region60
      $region59: #{adaattn_forward.1} parent=51 // pred_region
        %v1131 = vld [vmem:[#allocation5] sm:$0xff]
        %v1132 = vld [vmem:[#allocation5 + $0x8] sm:$0xff]
        %v1133 = vld [vmem:[#allocation5 + $0x10] sm:$0xff]
        %v1134 = vld [vmem:[#allocation5 + $0x18] sm:$0xff]
        %v1135 = vld [vmem:[#allocation5 + $0x20] sm:$0xff]
        %v1136 = vld [vmem:[#allocation5 + $0x28] sm:$0xff]
        %v1137 = vld [vmem:[#allocation5 + $0x30] sm:$0xff]
        %v1138 = vld [vmem:[#allocation5 + $0x38] sm:$0xff]
        %v1139 = vld [vmem:[#allocation5 + $0x40] sm:$0xff]
        %v1140 = vld [vmem:[#allocation5 + $0x48] sm:$0xff]
        %v1141 = vld [vmem:[#allocation5 + $0x50] sm:$0xff]
        %v1142 = vld [vmem:[#allocation5 + $0x58] sm:$0xff]
        %v1143 = vld [vmem:[#allocation5 + $0x60] sm:$0xff]
        %v1144 = vld [vmem:[#allocation5 + $0x68] sm:$0xff]
        %v1145 = vld [vmem:[#allocation5 + $0x70] sm:$0xff]
        %v1146 = vld [vmem:[#allocation5 + $0x78] sm:$0xff]
        %v1147 = vld [vmem:[#allocation4] sm:$0x3]
        %v1148 = vrcp.pop %v1147
        %v1150 = vlaneseq
        %v1151 = vshrl.u32 %v1150, 7
        %v1152 = vsub.s32 0, %v1151
        %v1153 = vrot.slane %v1148, %v1152
        %v1154 = vlaneseq
        %v1155 = vshrl.u32 %v1154, 7
        %v1156 = vsub.s32 1, %v1155
        %v1157 = vrot.slane %v1148, %v1156
        %v1160 = vmul.f32 %v1131, %v1153
        %v1161 = vmul.f32 %v1132, %v1157
        %v1162 = vmul.f32 %v1133, %v1153
        %v1163 = vmul.f32 %v1134, %v1157
        %v1164 = vmul.f32 %v1135, %v1153
        %v1165 = vmul.f32 %v1136, %v1157
        %v1166 = vmul.f32 %v1137, %v1153
        %v1167 = vmul.f32 %v1138, %v1157
        %v1168 = vmul.f32 %v1139, %v1153
        %v1169 = vmul.f32 %v1140, %v1157
        %v1170 = vmul.f32 %v1141, %v1153
        %v1171 = vmul.f32 %v1142, %v1157
        %v1172 = vmul.f32 %v1143, %v1153
        %v1173 = vmul.f32 %v1144, %v1157
        %v1174 = vmul.f32 %v1145, %v1153
        %v1175 = vmul.f32 %v1146, %v1157
        %v1176 = vmul.f32 %v1160, %v1160
        %v1177 = vmul.f32 %v1161, %v1161
        %v1178 = vmul.f32 %v1162, %v1162
        %v1179 = vmul.f32 %v1163, %v1163
        %v1180 = vmul.f32 %v1164, %v1164
        %v1181 = vmul.f32 %v1165, %v1165
        %v1182 = vmul.f32 %v1166, %v1166
        %v1183 = vmul.f32 %v1167, %v1167
        %v1184 = vsub.f32 %v1168, %v1176
        %v1185 = vsub.f32 %v1169, %v1177
        %v1186 = vsub.f32 %v1170, %v1178
        %v1187 = vsub.f32 %v1171, %v1179
        %v1188 = vsub.f32 %v1172, %v1180
        %v1189 = vsub.f32 %v1173, %v1181
        %v1190 = vsub.f32 %v1174, %v1182
        %v1191 = vsub.f32 %v1175, %v1183
        %v1192 = vmax.f32 %v1184, 0.0
        %v1193 = vmax.f32 %v1185, 0.0
        %v1194 = vmax.f32 %v1186, 0.0
        %v1195 = vmax.f32 %v1187, 0.0
        %v1196 = vmax.f32 %v1188, 0.0
        %v1197 = vmax.f32 %v1189, 0.0
        %v1198 = vmax.f32 %v1190, 0.0
        %v1199 = vmax.f32 %v1191, 0.0
        %v1200 = vrsqrt.pop %v1192
        %v1201 = vmul.f32 %v1192, %v1200
        %vm1202 = vcmp.eq.f32.partialorder %v1192, inf
        %v1203 = vsel %vm1202, %v1192, %v1201
        %vm1204 = vcmp.eq.f32.partialorder %v1192, 0.0
        %v1205 = vand.u32 %v1192, 2147483648
        %v1206 = vsel %vm1204, %v1205, %v1203
        %v1207 = vrsqrt.pop %v1193
        %v1208 = vmul.f32 %v1193, %v1207
        %vm1209 = vcmp.eq.f32.partialorder %v1193, inf
        %v1210 = vsel %vm1209, %v1193, %v1208
        %vm1211 = vcmp.eq.f32.partialorder %v1193, 0.0
        %v1212 = vand.u32 %v1193, 2147483648
        %v1213 = vsel %vm1211, %v1212, %v1210
        %v1214 = vrsqrt.pop %v1194
        %v1215 = vmul.f32 %v1194, %v1214
        %vm1216 = vcmp.eq.f32.partialorder %v1194, inf
        %v1217 = vsel %vm1216, %v1194, %v1215
        %vm1218 = vcmp.eq.f32.partialorder %v1194, 0.0
        %v1219 = vand.u32 %v1194, 2147483648
        %v1220 = vsel %vm1218, %v1219, %v1217
        %v1221 = vrsqrt.pop %v1195
        %v1222 = vmul.f32 %v1195, %v1221
        %vm1223 = vcmp.eq.f32.partialorder %v1195, inf
        %v1224 = vsel %vm1223, %v1195, %v1222
        %vm1225 = vcmp.eq.f32.partialorder %v1195, 0.0
        %v1226 = vand.u32 %v1195, 2147483648
        %v1227 = vsel %vm1225, %v1226, %v1224
        %v1228 = vrsqrt.pop %v1196
        %v1229 = vmul.f32 %v1196, %v1228
        %vm1230 = vcmp.eq.f32.partialorder %v1196, inf
        %v1231 = vsel %vm1230, %v1196, %v1229
        %vm1232 = vcmp.eq.f32.partialorder %v1196, 0.0
        %v1233 = vand.u32 %v1196, 2147483648
        %v1234 = vsel %vm1232, %v1233, %v1231
        %v1235 = vrsqrt.pop %v1197
        %v1236 = vmul.f32 %v1197, %v1235
        %vm1237 = vcmp.eq.f32.partialorder %v1197, inf
        %v1238 = vsel %vm1237, %v1197, %v1236
        %vm1239 = vcmp.eq.f32.partialorder %v1197, 0.0
        %v1240 = vand.u32 %v1197, 2147483648
        %v1241 = vsel %vm1239, %v1240, %v1238
        %v1242 = vrsqrt.pop %v1198
        %v1243 = vmul.f32 %v1198, %v1242
        %vm1244 = vcmp.eq.f32.partialorder %v1198, inf
        %v1245 = vsel %vm1244, %v1198, %v1243
        %vm1246 = vcmp.eq.f32.partialorder %v1198, 0.0
        %v1247 = vand.u32 %v1198, 2147483648
        %v1248 = vsel %vm1246, %v1247, %v1245
        %v1249 = vrsqrt.pop %v1199
        %v1250 = vmul.f32 %v1199, %v1249
        %vm1251 = vcmp.eq.f32.partialorder %v1199, inf
        %v1252 = vsel %vm1251, %v1199, %v1250
        %vm1253 = vcmp.eq.f32.partialorder %v1199, 0.0
        %v1254 = vand.u32 %v1199, 2147483648
        %v1255 = vsel %vm1253, %v1254, %v1252
        %v1256 = vld [vmem:[%s473] sm:$0xff]
        %v1257 = vld [vmem:[%s473 + $0x8] sm:$0xff]
        %v1258 = vld [vmem:[%s473 + $0x10] sm:$0xff]
        %v1259 = vld [vmem:[%s473 + $0x18] sm:$0xff]
        %v1260 = vld [vmem:[%s473 + $0x20] sm:$0xff]
        %v1261 = vld [vmem:[%s473 + $0x28] sm:$0xff]
        %v1262 = vld [vmem:[%s473 + $0x30] sm:$0xff]
        %v1263 = vld [vmem:[%s473 + $0x38] sm:$0xff]
        %v1264 = vld [vmem:[%s479] sm:$0xff]
        %v1265 = vld [vmem:[%s479 + $0x8] sm:$0xff]
        %v1266 = vld [vmem:[%s479 + $0x10] sm:$0xff]
        %v1267 = vld [vmem:[%s479 + $0x18] sm:$0xff]
        %1269 = vset.pattern.permute.xlu0 0
        %1270 = vperm.xlu0 %1269, %v1264
        %v1271 = vpop.permute.xlu0 %1270
        %1274 = vset.pattern.permute.xlu0 0
        %1275 = vperm.xlu0 %1274, %v1265
        %v1276 = vpop.permute.xlu0 %1275
        %1279 = vset.pattern.permute.xlu0 0
        %1280 = vperm.xlu0 %1279, %v1266
        %v1281 = vpop.permute.xlu0 %1280
        %1284 = vset.pattern.permute.xlu0 0
        %1285 = vperm.xlu0 %1284, %v1267
        %v1286 = vpop.permute.xlu0 %1285
        %v1288 = vsub.f32 %v1256, %v1271
        %v1289 = vsub.f32 %v1257, %v1271
        %v1290 = vsub.f32 %v1258, %v1276
        %v1291 = vsub.f32 %v1259, %v1276
        %v1292 = vsub.f32 %v1260, %v1281
        %v1293 = vsub.f32 %v1261, %v1281
        %v1294 = vsub.f32 %v1262, %v1286
        %v1295 = vsub.f32 %v1263, %v1286
        %v1296 = vmul.f32 %v1206, %v1288
        %v1297 = vmul.f32 %v1213, %v1289
        %v1298 = vmul.f32 %v1220, %v1290
        %v1299 = vmul.f32 %v1227, %v1291
        %v1300 = vmul.f32 %v1234, %v1292
        %v1301 = vmul.f32 %v1241, %v1293
        %v1302 = vmul.f32 %v1248, %v1294
        %v1303 = vmul.f32 %v1255, %v1295
        %v1304 = vld [vmem:[%s484] sm:$0xff]
        %v1305 = vld [vmem:[%s484 + $0x8] sm:$0xff]
        %v1306 = vld [vmem:[%s484 + $0x10] sm:$0xff]
        %v1307 = vld [vmem:[%s484 + $0x18] sm:$0xff]
        %1309 = vset.pattern.permute.xlu0 0
        %1310 = vperm.xlu0 %1309, %v1304
        %v1311 = vpop.permute.xlu0 %1310
        %1314 = vset.pattern.permute.xlu0 0
        %1315 = vperm.xlu0 %1314, %v1305
        %v1316 = vpop.permute.xlu0 %1315
        %1319 = vset.pattern.permute.xlu0 0
        %1320 = vperm.xlu0 %1319, %v1306
        %v1321 = vpop.permute.xlu0 %1320
        %1324 = vset.pattern.permute.xlu0 0
        %1325 = vperm.xlu0 %1324, %v1307
        %v1326 = vpop.permute.xlu0 %1325
        %v1328 = vmul.f32 %v1296, %v1311
        %v1329 = vmul.f32 %v1297, %v1311
        %v1330 = vmul.f32 %v1298, %v1316
        %v1331 = vmul.f32 %v1299, %v1316
        %v1332 = vmul.f32 %v1300, %v1321
        %v1333 = vmul.f32 %v1301, %v1321
        %v1334 = vmul.f32 %v1302, %v1326
        %v1335 = vmul.f32 %v1303, %v1326
        %v1336 = vadd.f32 %v1328, %v1160
        %v1337 = vadd.f32 %v1329, %v1161
        %v1338 = vadd.f32 %v1330, %v1162
        %v1339 = vadd.f32 %v1331, %v1163
        %v1340 = vadd.f32 %v1332, %v1164
        %v1341 = vadd.f32 %v1333, %v1165
        %v1342 = vadd.f32 %v1334, %v1166
        %v1343 = vadd.f32 %v1335, %v1167
        %1344 = vst [vmem:[%s493] sm:$0xff] %v1336
        %1345 = vst [vmem:[%s493 + $0x8] sm:$0xff] %v1337
        %1346 = vst [vmem:[%s493 + $0x10] sm:$0xff] %v1338
        %1347 = vst [vmem:[%s493 + $0x18] sm:$0xff] %v1339
        %1348 = vst [vmem:[%s493 + $0x20] sm:$0xff] %v1340
        %1349 = vst [vmem:[%s493 + $0x28] sm:$0xff] %v1341
        %1350 = vst [vmem:[%s493 + $0x30] sm:$0xff] %v1342
        %1351 = vst [vmem:[%s493 + $0x38] sm:$0xff] %v1343
      $region60: #{adaattn_forward.1} parent=51 // pred_fallthru
        _
      %s1352 = smul.u32 2, %s25
      %p1353 = scmp.lt.s32.totalorder %s24, 1
      %s1354 = scalar_select %p1353, %s24, 1
      %p1355 = scmp.lt.s32.totalorder %s1352, 1
      %s1356 = scalar_select %p1355, %s1352, 1
      %s1357 = smul.addr %s1354, 8
      %s1358 = sadd.s32 %s1356, %s1357
      %s1359 = smul.addr %s1358, 8
      %s1360 = scalar_lea.vmem %s8, %s1359
      // Predicated region
      $region61: #{adaattn_forward.1} parent=51 // pred_check
        %p1361 = pneg %p264
      $region62: #{adaattn_forward.1} parent=51 // pred_check_branch
        %1363 = sbr.rel (%p1361) target = $region64
      $region63: #{adaattn_forward.1} parent=51 // pred_region
        %s1364 = smul.u32 2, %s25
      $region64: #{adaattn_forward.1} parent=51 // pred_fallthru
        _
    $region52: #{adaattn_forward.1} parent=5 // pred_fallthru
      _
    %p1365 = scmp.le.s32.totalorder 2, %s14
    // Predicated region
    $region65: #{adaattn_forward.1} parent=5 // pred_check
      %p1366 = pneg %p1365
    $region66: #{adaattn_forward.1} parent=5 // pred_check_branch
      %1368 = sbr.rel (%p1366) target = $region68
    $region67: #{adaattn_forward.1} parent=5 // pred_region
      %s1369 = ssub.s32 %s14, 2
      // Predicated region
      $region69: #{adaattn_forward.1} parent=67 // pred_check
        %p1370 = pneg %p270
      $region70: #{adaattn_forward.1} parent=67 // pred_check_branch
        %1372 = sbr.rel (%p1370) target = $region72
      $region71: #{adaattn_forward.1} parent=67 // pred_region
        %s1373 = smul.u32 2, %s28
        %p1374 = scmp.lt.s32.totalorder %s27, 1
        %s1375 = scalar_select %p1374, %s27, 1
        %p1376 = scmp.lt.s32.totalorder %s1373, 1
        %s1377 = scalar_select %p1376, %s1373, 1
        %s1378 = smul.addr %s1375, 8
        %s1379 = sadd.s32 %s1377, %s1378
        %s1380 = smul.addr %s1379, 8
        %s1381 = scalar_lea.vmem %s8, %s1380
      $region72: #{adaattn_forward.1} parent=67 // pred_fallthru
        _
    $region68: #{adaattn_forward.1} parent=5 // pred_fallthru
      _
  $region6: #{adaattn_forward.1} parent=0 // loop_footer
    %s18 = sadd.s32 1, %s14
  $region7: #{adaattn_forward.1} parent=0 // loop_footer_branch
    %13 = sbr.rel target = $region3
  $region8: #{adaattn_forward.1} parent=0 // loop_exit
    _

</llo_original>
